<compile_context>
chip_gen: v7x
topology: tpu7x:2x2x1
jax: 0.10.0
libtpu: 0.0.40
codegen_flags: <defaults>
</compile_context>

<pallas_src>
import numpy as np
import jax
import jax.numpy as jnp
from jax.experimental import pallas as pl
from jax.experimental.pallas import tpu as pltpu


def _gaussian_1d(window_size, sigma=1.5):
    xs = np.arange(window_size, dtype=np.float64)
    g = np.exp(-((xs - window_size // 2) ** 2) / (2.0 * sigma ** 2))
    return (g / g.sum()).astype(np.float32)


def _band_matrix(n, gauss):
    """M[i, j] = gauss[j - i + pad]; the truncated band == zero 'same' padding."""
    ws = int(gauss.shape[0])
    pad = ws // 2
    m = np.zeros((n, n), np.float32)
    for i in range(n):
        for j in range(max(0, i - pad), min(n, i + pad + 1)):
            m[i, j] = gauss[j - i + pad]
    return m


def _vmem_plan(height, width):
    """Generation-aware (vmem_limit_bytes, max_rows) tile budget."""
    try:
        cap = int(pltpu.get_tpu_info().vmem_capacity_bytes)
    except Exception:                       # no TPU info available at trace time
        cap = 64 * 1024 * 1024              # assume v7x (smallest VMEM)
    vmem_limit = min(int(cap * 0.7), 100 * 1024 * 1024)
    # Per-row footprint of a (rows, W) f32 tile: 2 inputs x 2 pipeline buffers
    # plus ~14 live in-kernel temporaries (x1, x2, products, 5x yh, epilogue).
    bytes_per_row = 18 * width * 4
    fixed = 4 * width * width + 4 * max(256, height) ** 2 + (2 << 20)
    max_rows = max(8, (vmem_limit - fixed) // bytes_per_row)
    return vmem_limit, int(min(max_rows, 2048))


def _choose_planes_per_step(n_planes, height, max_rows):
    """Pick P | N with (P*H) % 8 == 0 and P*H <= max_rows, preferring G >= 2."""
    legal = [p for p in range(1, n_planes + 1)
             if n_planes % p == 0 and (p * height) % 8 == 0]
    if not legal:
        # Full-extent block is always a legal BlockSpec.
        # TODO(synk): pad the plane/height axis for huge N*H with odd H; this
        # fallback can exceed the per-generation VMEM budget.
        return n_planes
    fitting = [p for p in legal if p * height <= max_rows]
    if not fitting:
        return min(legal)
    # Prefer >= 2 grid steps so the "parallel" axis can span both v7x TensorCores
    # (one extra ~0.35 us grid step on single-TC v5e/v6e is negligible).
    multi = [p for p in fitting if n_planes // p >= 2]
    return max(multi) if multi else max(fitting)


def _choose_vertical_group(planes_per_step, height, target=256):
    """Largest divisor KV of P with KV*H <= target (~one MXU tile of rows)."""
    best = 1
    for k in range(1, planes_per_step + 1):
        if planes_per_step % k == 0 and k * height <= target:
            best = k
    return best


def _const_block_spec(shape):
    """Grid-invariant operand: single VMEM buffer (no pointless double-buffer)."""
    index_map = lambda i: (0,) * len(shape)
    try:
        return pl.BlockSpec(shape, index_map, pipeline_mode=pl.Buffered(1))
    except Exception:   # older BlockSpec without pipeline_mode support
        return pl.BlockSpec(shape, index_map)


def _ssim_group_kernel(x1_ref, x2_ref, bh_ref, av_ref, out_ref):
    """One grid step: P planes stacked along sublanes -> per-step partial sum."""
    rows = x1_ref.shape[0]                       # P * H
    kvh = av_ref.shape[0]                        # KV * H (vertical block size)
    n_vblocks = rows // kvh

    x1 = x1_ref[...]                             # (P*H, W) f32
    x2 = x2_ref[...]
    bh = bh_ref[...]                             # (W, W)   horizontal band (RHS)
    av = av_ref[...]                             # (KV*H, KV*H) block-diag vertical band

    # Horizontal Gaussian pass: five MXU matmuls sharing the same RHS
    # (zero 'same' padding is folded into the truncated band of bh).
    yh1 = jnp.dot(x1, bh, preferred_element_type=jnp.float32)
    yh2 = jnp.dot(x2, bh, preferred_element_type=jnp.float32)
    yh11 = jnp.dot(x1 * x1, bh, preferred_element_type=jnp.float32)
    yh22 = jnp.dot(x2 * x2, bh, preferred_element_type=jnp.float32)
    yh12 = jnp.dot(x1 * x2, bh, preferred_element_type=jnp.float32)

    c1 = 0.01 ** 2
    c2 = 0.03 ** 2

    total = jnp.zeros((1, 1), jnp.float32)
    # Vertical pass + fused epilogue per group of KV planes: only (KV*H, W)-sized
    # temporaries stay live and no concatenation of results is materialized.
    for g in range(n_vblocks):                   # static unroll
        lo = g * kvh

        def vpass(y):
            return jnp.dot(av, y[lo:lo + kvh, :],
                           preferred_element_type=jnp.float32)

        mu1 = vpass(yh1)
        mu2 = vpass(yh2)
        e11 = vpass(yh11)
        e22 = vpass(yh22)
        e12 = vpass(yh12)

        mu1_sq = mu1 * mu1
        mu2_sq = mu2 * mu2
        mu1_mu2 = mu1 * mu2
        num = (2.0 * mu1_mu2 + c1) * (2.0 * (e12 - mu1_mu2) + c2)
        den = (mu1_sq + mu2_sq + c1) * ((e11 - mu1_sq) + (e22 - mu2_sq) + c2)
        total = total + jnp.sum(num * pl.reciprocal(den, approx=True),
                                keepdims=True)

    # Per-step partial sum written to this step's own lane-dense output block
    # (no shared accumulator -> the grid axis is safely "parallel").
    out_ref[...] = jnp.broadcast_to(total, out_ref.shape)


def ssim(img1, img2, window_size=11, size_average=True):
    # TODO(synk): size_average=False (per-image mean) not implemented; module default is True.
    assert size_average
    B, C, H, W = img1.shape
    N = B * C

    vmem_limit, max_rows = _vmem_plan(H, W)
    P = _choose_planes_per_step(N, H, max_rows)
    G = N // P
    rows = P * H
    KV = _choose_vertical_group(P, H)

    # Free reshapes (merge of contiguous dims) -- no host pad, no extra HBM copy.
    x1 = img1.astype(jnp.float32).reshape(N * H, W)
    x2 = img2.astype(jnp.float32).reshape(N * H, W)

    g = _gaussian_1d(window_size)
    bh = jnp.asarray(_band_matrix(W, g).T)                           # (W, W) horizontal
    av = jnp.asarray(np.kron(np.eye(KV, dtype=np.float32),
                             _band_matrix(H, g)))                    # (KV*H, KV*H)

    # TODO(synk): for W < 128 an 11-tap pltpu.roll shift-and-add conv (pure VPU/XLU)
    # would beat the mostly-empty MXU; not implemented here.
    # TODO(synk): for very large H*W add H-strip tiling (row halo) so even a single
    # plane fits the per-generation VMEM budget.
    partials = pl.pallas_call(
        _ssim_group_kernel,
        out_shape=jax.ShapeDtypeStruct((G, 8, 128), jnp.float32),
        grid_spec=pltpu.PrefetchScalarGridSpec(
            num_scalar_prefetch=0,
            grid=(G,),
            in_specs=[
                pl.BlockSpec((rows, W), lambda i: (i, 0)),
                pl.BlockSpec((rows, W), lambda i: (i, 0)),
                _const_block_spec((W, W)),
                _const_block_spec((KV * H, KV * H)),
            ],
            out_specs=pl.BlockSpec((None, 8, 128), lambda i: (i, 0, 0)),
        ),
        compiler_params=pltpu.CompilerParams(
            dimension_semantics=("parallel",),
            vmem_limit_bytes=int(vmem_limit),
        ),
    )(x1, x2, bh, av)

    total = jnp.sum(partials[:, 0, 0])
    return total / (N * H * W)


def _ssim_reference_np(img1, img2, window_size=11):
    """Float64 numpy reference matching the PyTorch module (zero-padded conv)."""
    x1 = np.asarray(img1, np.float64)
    x2 = np.asarray(img2, np.float64)
    B, C, H, W = x1.shape
    g = _gaussian_1d(window_size).astype(np.float64)
    pad = window_size // 2

    def conv(x):
        xp = np.pad(x, ((0, 0), (0, 0), (pad, pad), (pad, pad)))
        h = np.zeros((B, C, H + 2 * pad, W), np.float64)
        for k in range(window_size):
            h += g[k] * xp[:, :, :, k:k + W]
        v = np.zeros((B, C, H, W), np.float64)
        for k in range(window_size):
            v += g[k] * h[:, :, k:k + H, :]
        return v

    mu1, mu2 = conv(x1), conv(x2)
    mu1_sq, mu2_sq, mu1_mu2 = mu1 * mu1, mu2 * mu2, mu1 * mu2
    sigma1_sq = conv(x1 * x1) - mu1_sq
    sigma2_sq = conv(x2 * x2) - mu2_sq
    sigma12 = conv(x1 * x2) - mu1_mu2
    C1, C2 = 0.01 ** 2, 0.03 ** 2
    ssim_map = ((2 * mu1_mu2 + C1) * (2 * sigma12 + C2)) / (
        (mu1_sq + mu2_sq + C1) * (sigma1_sq + sigma2_sq + C2))
    return float(ssim_map.mean())


if __name__ == "__main__":
    key = jax.random.PRNGKey(0)
    k1, k2 = jax.random.split(key)
    img1 = jax.random.uniform(k1, (2, 4, 16, 16), dtype=jnp.float32)
    img2 = jax.random.uniform(k2, (2, 4, 16, 16), dtype=jnp.float32)

    out = ssim(img1, img2)
    out = jax.block_until_ready(out)

    ref = _ssim_reference_np(np.asarray(img1), np.asarray(img2))
    # f32 MXU matmuls + approx reciprocal vs a float64 reference -> modest tolerance.
    assert abs(float(out) - ref) < 1e-3, (float(out), ref)

    print("KERNEL_OK")
</pallas_src>

<mosaic_0001>
module attributes {stable_mosaic.version = 11 : i64} {
  func.func @_ssim_group_kernel(%arg0: i32, %arg1: memref<64x16xf32, #tpu.memory_space<vmem>>, %arg2: memref<64x16xf32, #tpu.memory_space<vmem>>, %arg3: memref<16x16xf32, #tpu.memory_space<vmem>>, %arg4: memref<64x64xf32, #tpu.memory_space<vmem>>, %arg5: memref<1x8x128xf32, #tpu.memory_space<vmem>>) attributes {dimension_semantics = [#tpu.dimension_semantics<parallel>], iteration_bounds = array<i64: 2>, scalar_prefetch = 0 : i64, scratch_operands = 0 : i64, tpu.core_type = #tpu.core_type<tc>, window_params = [{transform_indices = @transform_0, window_bounds = array<i64: 64, 16>}, {transform_indices = @transform_1, window_bounds = array<i64: 64, 16>}, {pipeline_mode = #tpu.pipeline_mode<synchronous>, transform_indices = @transform_2, window_bounds = array<i64: 16, 16>}, {pipeline_mode = #tpu.pipeline_mode<synchronous>, transform_indices = @transform_3, window_bounds = array<i64: 64, 64>}, {transform_indices = @transform_4, window_bounds = array<i64: 1, 8, 128>}]} {
    %c0 = arith.constant 0 : index
    %c0_0 = arith.constant 0 : index
    %0 = vector.load %arg1[%c0, %c0_0] : memref<64x16xf32, #tpu.memory_space<vmem>>, vector<64x16xf32>
    %c0_1 = arith.constant 0 : index
    %c0_2 = arith.constant 0 : index
    %1 = vector.load %arg2[%c0_1, %c0_2] : memref<64x16xf32, #tpu.memory_space<vmem>>, vector<64x16xf32>
    %c0_3 = arith.constant 0 : index
    %c0_4 = arith.constant 0 : index
    %2 = vector.load %arg3[%c0_3, %c0_4] : memref<16x16xf32, #tpu.memory_space<vmem>>, vector<16x16xf32>
    %c0_5 = arith.constant 0 : index
    %c0_6 = arith.constant 0 : index
    %3 = vector.load %arg4[%c0_5, %c0_6] : memref<64x64xf32, #tpu.memory_space<vmem>>, vector<64x64xf32>
    %cst = arith.constant dense<0.000000e+00> : vector<64x16xf32>
    %4 = tpu.matmul %0, %2, %cst {dimension_numbers = #tpu.dot_dimension_numbers<[1], [0], [0], [1], [0, 0, 1, 1], [], []>} : vector<64x16xf32>, vector<16x16xf32>, vector<64x16xf32> -> vector<64x16xf32>
    %cst_7 = arith.constant dense<0.000000e+00> : vector<64x16xf32>
    %5 = tpu.matmul %1, %2, %cst_7 {dimension_numbers = #tpu.dot_dimension_numbers<[1], [0], [0], [1], [0, 0, 1, 1], [], []>} : vector<64x16xf32>, vector<16x16xf32>, vector<64x16xf32> -> vector<64x16xf32>
    %6 = arith.mulf %0, %0 : vector<64x16xf32>
    %cst_8 = arith.constant dense<0.000000e+00> : vector<64x16xf32>
    %7 = tpu.matmul %6, %2, %cst_8 {dimension_numbers = #tpu.dot_dimension_numbers<[1], [0], [0], [1], [0, 0, 1, 1], [], []>} : vector<64x16xf32>, vector<16x16xf32>, vector<64x16xf32> -> vector<64x16xf32>
    %8 = arith.mulf %1, %1 : vector<64x16xf32>
    %cst_9 = arith.constant dense<0.000000e+00> : vector<64x16xf32>
    %9 = tpu.matmul %8, %2, %cst_9 {dimension_numbers = #tpu.dot_dimension_numbers<[1], [0], [0], [1], [0, 0, 1, 1], [], []>} : vector<64x16xf32>, vector<16x16xf32>, vector<64x16xf32> -> vector<64x16xf32>
    %10 = arith.mulf %0, %1 : vector<64x16xf32>
    %cst_10 = arith.constant dense<0.000000e+00> : vector<64x16xf32>
    %11 = tpu.matmul %10, %2, %cst_10 {dimension_numbers = #tpu.dot_dimension_numbers<[1], [0], [0], [1], [0, 0, 1, 1], [], []>} : vector<64x16xf32>, vector<16x16xf32>, vector<64x16xf32> -> vector<64x16xf32>
    %cst_11 = arith.constant 0.000000e+00 : f32
    %12 = vector.broadcast %cst_11 : f32 to vector<1x1xf32>
    %cst_12 = arith.constant dense<0.000000e+00> : vector<64x16xf32>
    %13 = tpu.matmul %3, %4, %cst_12 {dimension_numbers = #tpu.dot_dimension_numbers<[1], [0], [0], [1], [0, 0, 1, 1], [], []>} : vector<64x64xf32>, vector<64x16xf32>, vector<64x16xf32> -> vector<64x16xf32>
    %cst_13 = arith.constant dense<0.000000e+00> : vector<64x16xf32>
    %14 = tpu.matmul %3, %5, %cst_13 {dimension_numbers = #tpu.dot_dimension_numbers<[1], [0], [0], [1], [0, 0, 1, 1], [], []>} : vector<64x64xf32>, vector<64x16xf32>, vector<64x16xf32> -> vector<64x16xf32>
    %cst_14 = arith.constant dense<0.000000e+00> : vector<64x16xf32>
    %15 = tpu.matmul %3, %7, %cst_14 {dimension_numbers = #tpu.dot_dimension_numbers<[1], [0], [0], [1], [0, 0, 1, 1], [], []>} : vector<64x64xf32>, vector<64x16xf32>, vector<64x16xf32> -> vector<64x16xf32>
    %cst_15 = arith.constant dense<0.000000e+00> : vector<64x16xf32>
    %16 = tpu.matmul %3, %9, %cst_15 {dimension_numbers = #tpu.dot_dimension_numbers<[1], [0], [0], [1], [0, 0, 1, 1], [], []>} : vector<64x64xf32>, vector<64x16xf32>, vector<64x16xf32> -> vector<64x16xf32>
    %cst_16 = arith.constant dense<0.000000e+00> : vector<64x16xf32>
    %17 = tpu.matmul %3, %11, %cst_16 {dimension_numbers = #tpu.dot_dimension_numbers<[1], [0], [0], [1], [0, 0, 1, 1], [], []>} : vector<64x64xf32>, vector<64x16xf32>, vector<64x16xf32> -> vector<64x16xf32>
    %18 = arith.mulf %13, %13 : vector<64x16xf32>
    %19 = arith.mulf %14, %14 : vector<64x16xf32>
    %20 = arith.mulf %13, %14 : vector<64x16xf32>
    %cst_17 = arith.constant 2.000000e+00 : f32
    %21 = vector.broadcast %cst_17 : f32 to vector<64x16xf32>
    %22 = arith.mulf %21, %20 : vector<64x16xf32>
    %cst_18 = arith.constant 9.99999974E-5 : f32
    %23 = vector.broadcast %cst_18 : f32 to vector<64x16xf32>
    %24 = arith.addf %22, %23 : vector<64x16xf32>
    %25 = arith.subf %17, %20 : vector<64x16xf32>
    %cst_19 = arith.constant 2.000000e+00 : f32
    %26 = vector.broadcast %cst_19 : f32 to vector<64x16xf32>
    %27 = arith.mulf %26, %25 : vector<64x16xf32>
    %cst_20 = arith.constant 8.99999984E-4 : f32
    %28 = vector.broadcast %cst_20 : f32 to vector<64x16xf32>
    %29 = arith.addf %27, %28 : vector<64x16xf32>
    %30 = arith.mulf %24, %29 : vector<64x16xf32>
    %31 = arith.addf %18, %19 : vector<64x16xf32>
    %cst_21 = arith.constant 9.99999974E-5 : f32
    %32 = vector.broadcast %cst_21 : f32 to vector<64x16xf32>
    %33 = arith.addf %31, %32 : vector<64x16xf32>
    %34 = arith.subf %15, %18 : vector<64x16xf32>
    %35 = arith.subf %16, %19 : vector<64x16xf32>
    %36 = arith.addf %34, %35 : vector<64x16xf32>
    %cst_22 = arith.constant 8.99999984E-4 : f32
    %37 = vector.broadcast %cst_22 : f32 to vector<64x16xf32>
    %38 = arith.addf %36, %37 : vector<64x16xf32>
    %39 = arith.mulf %33, %38 : vector<64x16xf32>
    %40 = tpu.reciprocal %39 {approx = true} : vector<64x16xf32> -> vector<64x16xf32>
    %41 = arith.mulf %30, %40 : vector<64x16xf32>
    %42 = vector.shape_cast %41 : vector<64x16xf32> to vector<1x64x16xf32>
    %cst_23 = arith.constant dense<0.000000e+00> : vector<1xf32>
    %43 = vector.multi_reduction <add>, %42, %cst_23 [1, 2] : vector<1x64x16xf32> to vector<1xf32>
    %44 = vector.shape_cast %43 : vector<1xf32> to vector<1x1x1xf32>
    %45 = vector.extract %44[0, 0, 0] : f32 from vector<1x1x1xf32>
    %46 = vector.broadcast %45 : f32 to vector<1x1xf32>
    %47 = arith.addf %12, %46 : vector<1x1xf32>
    %48 = vector.shape_cast %47 : vector<1x1xf32> to vector<1x1xf32>
    %49 = vector.broadcast %48 : vector<1x1xf32> to vector<8x128xf32>
    %c0_24 = arith.constant 0 : index
    %c0_25 = arith.constant 0 : index
    %c0_26 = arith.constant 0 : index
    %50 = vector.load %arg5[%c0_24, %c0_25, %c0_26] : memref<1x8x128xf32, #tpu.memory_space<vmem>>, vector<1x8x128xf32>
    %51 = vector.shape_cast %50 : vector<1x8x128xf32> to vector<8x128xf32>
    %52 = vector.shape_cast %49 : vector<8x128xf32> to vector<1x8x128xf32>
    tpu.vector_store %arg5[%c0_24, %c0_25, %c0_26], %52 {strides = array<i32>} : memref<1x8x128xf32, #tpu.memory_space<vmem>>, vector<1x8x128xf32>,
    return
  }
  func.func @transform_0(%arg0: i32) -> (i32, i32) {
    %c0_i32 = arith.constant 0 : i32
    %c0_i32_0 = arith.constant 0 : i32
    return %arg0, %c0_i32 : i32, i32
  }
  func.func @transform_1(%arg0: i32) -> (i32, i32) {
    %c0_i32 = arith.constant 0 : i32
    %c0_i32_0 = arith.constant 0 : i32
    return %arg0, %c0_i32 : i32, i32
  }
  func.func @transform_2(%arg0: i32) -> (i32, i32) {
    %c0_i32 = arith.constant 0 : i32
    %c0_i32_0 = arith.constant 0 : i32
    %c0_i32_1 = arith.constant 0 : i32
    return %c0_i32, %c0_i32_0 : i32, i32
  }
  func.func @transform_3(%arg0: i32) -> (i32, i32) {
    %c0_i32 = arith.constant 0 : i32
    %c0_i32_0 = arith.constant 0 : i32
    %c0_i32_1 = arith.constant 0 : i32
    return %c0_i32, %c0_i32_0 : i32, i32
  }
  func.func @transform_4(%arg0: i32) -> (i32, i32, i32) {
    %c0_i32 = arith.constant 0 : i32
    %c0_i32_0 = arith.constant 0 : i32
    %c0_i32_1 = arith.constant 0 : i32
    return %arg0, %c0_i32, %c0_i32_0 : i32, i32, i32
  }
}

</mosaic_0001>

<llo_original>
// kernel: tpu_custom_call.1
$region0: #{tpu_custom_call.1}
  #allocation0 [shape = 'u32[]', space=smem, size = 0x4, offset = 0x4, fixed_abs, tag = 'smem constant byte address 0x4 - core index']
  #allocation1 [shape = 'u32[144,128]{1,0:T(1,128)}', space=vmem, size = 0x12000, scoped, tag = 'internal scratch']
  %s0 = inlined_call_operand.vmem [shape: f32[128,16], index: 0, kind: input, shape index: {}]
  %s1 = inlined_call_operand.vmem [shape: f32[128,16], index: 1, kind: input, shape index: {}]
  %s2 = inlined_call_operand.vmem [shape: f32[16,16], index: 2, kind: input, shape index: {}]
  %s3 = inlined_call_operand.vmem [shape: f32[64,64], index: 3, kind: input, shape index: {}]
  %s4 = inlined_call_operand.hbm [shape: f32[2,8,128], index: 4, kind: output, shape index: {}]
  %s5 = sld [smem:[#allocation0]]
  $region49: #{tpu_custom_call.1} parent=0
    _
  %s7 = ssub.s32 1, %s5
  %s8 = scalar_select 0, %s7, %s5
  $region1: #{tpu_custom_call.1} parent=0
    #allocation2 [shape = 'u8[8192]{0}', space=vmem, size = 0x2000, scoped, tag = 'output window, operand 0']
    #allocation3 [shape = 's32[2]{0}', space=sflag, size = 0x8, scoped, tag = 'scoped memory for tpu_custom_call.1']
    %9 = vsyncpa [#allocation3], 0
    %s10 = scalar_lea.sflag [#allocation3], 1
    %11 = vsyncpa %s10, 0
    loop: start=0, step=1, limit=4
    $region2: #{tpu_custom_call.1} parent=1 // loop_pre_header
      _
    $region3: #{tpu_custom_call.1} parent=1 // loop_header
      %s13 = sphi 0, %s17
      %p14 = scmp.ge.s32.totalorder %s13, 4
      %s23 = sphi 0, %s25
      %s26 = sphi 0, %s23
      %s27 = sphi 0, %s26
      %s43 = sphi 0, %s27
      %s49 = sphi 0, %s51
      %s52 = sphi 0, %s49
      %s53 = sphi 0, %s52
      %s69 = sphi 0, %s53
      %s73 = sphi 0, %s73
      %s75 = sphi 0, %s73
      %s76 = sphi 0, %s75
      %s90 = sphi 0, %s76
      %s94 = sphi 0, %s94
      %s96 = sphi 0, %s94
      %s97 = sphi 0, %s96
      %s111 = sphi 0, %s97
      %s117 = sphi 0, %s119
      %s120 = sphi 0, %s117
      %s121 = sphi 0, %s120
      %s137 = sphi 0, %s121
    $region4: #{tpu_custom_call.1} parent=1 // loop_header_branch
      %16 = sbr.rel (%p14) target = $region8
    $region5: #{tpu_custom_call.1} parent=1 // loop_body
      %s18 = ssub.s32 %s13, 1
      %s19 = ssub.s32 %s13, 2
      %s20 = sadd.s32 %s13, 1
      %s21 = ssub.s32 %s13, %s20
      %p22 = scmp.eq.s32.totalorder %s21, 0
      %s24 = sadd.s32 %s23, 1
      %s25 = scalar_select %p22, %s23, %s24
      %p28 = pneg %p22
      %p29 = scmp.eq.s32.totalorder %s13, 1
      %p30 = por %p28, %p29
      %p31 = scmp.ne.s32.totalorder %s23, %s26
      %p32 = scmp.eq.s32.totalorder %s13, 0
      %p33 = por %p31, %p32
      %p34 = scmp.ne.s32.totalorder %s23, %s26
      %p35 = scmp.eq.s32.totalorder %s18, 1
      %p36 = por %p34, %p35
      %p37 = scmp.ne.s32.totalorder %s26, %s27
      %p38 = scmp.eq.s32.totalorder %s18, 0
      %p39 = por %p37, %p38
      %p40 = scmp.ne.s32.totalorder %s26, %s27
      %p41 = scmp.eq.s32.totalorder %s19, 1
      %p42 = por %p40, %p41
      %p44 = scmp.ne.s32.totalorder %s27, %s43
      %p45 = scmp.eq.s32.totalorder %s19, 0
      %p46 = por %p44, %p45
      %s47 = ssub.s32 %s13, %s20
      %p48 = scmp.eq.s32.totalorder %s47, 0
      %s50 = sadd.s32 %s49, 1
      %s51 = scalar_select %p48, %s49, %s50
      %p54 = pneg %p48
      %p55 = scmp.eq.s32.totalorder %s13, 1
      %p56 = por %p54, %p55
      %p57 = scmp.ne.s32.totalorder %s49, %s52
      %p58 = scmp.eq.s32.totalorder %s13, 0
      %p59 = por %p57, %p58
      %p60 = scmp.ne.s32.totalorder %s49, %s52
      %p61 = scmp.eq.s32.totalorder %s18, 1
      %p62 = por %p60, %p61
      %p63 = scmp.ne.s32.totalorder %s52, %s53
      %p64 = scmp.eq.s32.totalorder %s18, 0
      %p65 = por %p63, %p64
      %p66 = scmp.ne.s32.totalorder %s52, %s53
      %p67 = scmp.eq.s32.totalorder %s19, 1
      %p68 = por %p66, %p67
      %p70 = scmp.ne.s32.totalorder %s53, %s69
      %p71 = scmp.eq.s32.totalorder %s19, 0
      %p72 = por %p70, %p71
      %s74 = sadd.s32 %s73, 1
      %p77 = scmp.eq.s32.totalorder %s13, 1
      %p78 = scmp.ne.s32.totalorder %s73, %s75
      %p79 = scmp.eq.s32.totalorder %s13, 0
      %p80 = por %p78, %p79
      %p81 = scmp.ne.s32.totalorder %s73, %s75
      %p82 = scmp.eq.s32.totalorder %s18, 1
      %p83 = por %p81, %p82
      %p84 = scmp.ne.s32.totalorder %s75, %s76
      %p85 = scmp.eq.s32.totalorder %s18, 0
      %p86 = por %p84, %p85
      %p87 = scmp.ne.s32.totalorder %s75, %s76
      %p88 = scmp.eq.s32.totalorder %s19, 1
      %p89 = por %p87, %p88
      %p91 = scmp.ne.s32.totalorder %s76, %s90
      %p92 = scmp.eq.s32.totalorder %s19, 0
      %p93 = por %p91, %p92
      %s95 = sadd.s32 %s94, 1
      %p98 = scmp.eq.s32.totalorder %s13, 1
      %p99 = scmp.ne.s32.totalorder %s94, %s96
      %p100 = scmp.eq.s32.totalorder %s13, 0
      %p101 = por %p99, %p100
      %p102 = scmp.ne.s32.totalorder %s94, %s96
      %p103 = scmp.eq.s32.totalorder %s18, 1
      %p104 = por %p102, %p103
      %p105 = scmp.ne.s32.totalorder %s96, %s97
      %p106 = scmp.eq.s32.totalorder %s18, 0
      %p107 = por %p105, %p106
      %p108 = scmp.ne.s32.totalorder %s96, %s97
      %p109 = scmp.eq.s32.totalorder %s19, 1
      %p110 = por %p108, %p109
      %p112 = scmp.ne.s32.totalorder %s97, %s111
      %p113 = scmp.eq.s32.totalorder %s19, 0
      %p114 = por %p112, %p113
      %s115 = ssub.s32 %s13, %s20
      %p116 = scmp.eq.s32.totalorder %s115, 0
      %s118 = sadd.s32 %s117, 1
      %s119 = scalar_select %p116, %s117, %s118
      %p122 = pneg %p116
      %p123 = scmp.eq.s32.totalorder %s13, 1
      %p124 = por %p122, %p123
      %p125 = scmp.ne.s32.totalorder %s117, %s120
      %p126 = scmp.eq.s32.totalorder %s13, 0
      %p127 = por %p125, %p126
      %p128 = scmp.ne.s32.totalorder %s117, %s120
      %p129 = scmp.eq.s32.totalorder %s18, 1
      %p130 = por %p128, %p129
      %p131 = scmp.ne.s32.totalorder %s120, %s121
      %p132 = scmp.eq.s32.totalorder %s18, 0
      %p133 = por %p131, %p132
      %p134 = scmp.ne.s32.totalorder %s120, %s121
      %p135 = scmp.eq.s32.totalorder %s19, 1
      %p136 = por %p134, %p135
      %p138 = scmp.ne.s32.totalorder %s121, %s137
      %p139 = scmp.eq.s32.totalorder %s19, 0
      %p140 = por %p138, %p139
      %p141 = scmp.le.s32.totalorder 1, %s13
      %p142 = scmp.lt.s32.totalorder %s13, 3
      %p143 = pnand %p141, %p142
      %p144 = pneg %p143
      // Predicated region
      $region9: #{tpu_custom_call.1} parent=5 // pred_check
        _
      $region10: #{tpu_custom_call.1} parent=5 // pred_check_branch
        %146 = sbr.rel (%p143) target = $region12
      $region11: #{tpu_custom_call.1} parent=5 // pred_region
        %s147 = ssub.s32 %s13, 1
        // Predicated region
        $region13: #{tpu_custom_call.1} parent=11 // pred_check
          %p148 = pneg %p86
        $region14: #{tpu_custom_call.1} parent=11 // pred_check_branch
          %150 = sbr.rel (%p148) target = $region16
        $region15: #{tpu_custom_call.1} parent=11 // pred_region
          _
        $region16: #{tpu_custom_call.1} parent=11 // pred_fallthru
          _
        // Predicated region
        $region17: #{tpu_custom_call.1} parent=11 // pred_check
          %p151 = pneg %p107
        $region18: #{tpu_custom_call.1} parent=11 // pred_check_branch
          %153 = sbr.rel (%p151) target = $region20
        $region19: #{tpu_custom_call.1} parent=11 // pred_region
          _
        $region20: #{tpu_custom_call.1} parent=11 // pred_fallthru
          _
      $region12: #{tpu_custom_call.1} parent=5 // pred_fallthru
        _
      %p154 = scmp.lt.s32.totalorder %s13, 2
      // Predicated region
      $region21: #{tpu_custom_call.1} parent=5 // pred_check
        %p155 = pneg %p154
      $region22: #{tpu_custom_call.1} parent=5 // pred_check_branch
        %157 = sbr.rel (%p155) target = $region24
      $region23: #{tpu_custom_call.1} parent=5 // pred_region
        // Predicated region
        $region25: #{tpu_custom_call.1} parent=23 // pred_check
          %p158 = pneg %p33
        $region26: #{tpu_custom_call.1} parent=23 // pred_check_branch
          %160 = sbr.rel (%p158) target = $region28
        $region27: #{tpu_custom_call.1} parent=23 // pred_region
          %s161 = smul.u32 8, %s13
          %p162 = scmp.lt.s32.totalorder %s161, 15
          %s163 = scalar_select %p162, %s161, 15
          %s164 = smul.addr %s163, 8
          %s165 = scalar_lea.vmem %s0, %s164
          %s166 = smul.u32 8, %s13
        $region28: #{tpu_custom_call.1} parent=23 // pred_fallthru
          _
        // Predicated region
        $region29: #{tpu_custom_call.1} parent=23 // pred_check
          %p167 = pneg %p59
        $region30: #{tpu_custom_call.1} parent=23 // pred_check_branch
          %169 = sbr.rel (%p167) target = $region32
        $region31: #{tpu_custom_call.1} parent=23 // pred_region
          %s170 = smul.u32 8, %s13
          %p171 = scmp.lt.s32.totalorder %s170, 15
          %s172 = scalar_select %p171, %s170, 15
          %s173 = smul.addr %s172, 8
          %s174 = scalar_lea.vmem %s1, %s173
          %s175 = smul.u32 8, %s13
        $region32: #{tpu_custom_call.1} parent=23 // pred_fallthru
          _
      $region24: #{tpu_custom_call.1} parent=5 // pred_fallthru
        _
      %p176 = scmp.le.s32.totalorder 1, %s13
      %p177 = scmp.lt.s32.totalorder %s13, 3
      %p178 = pnand %p176, %p177
      %p179 = pneg %p178
      // Predicated region
      $region33: #{tpu_custom_call.1} parent=5 // pred_check
        _
      $region34: #{tpu_custom_call.1} parent=5 // pred_check_branch
        %181 = sbr.rel (%p178) target = $region36
      $region35: #{tpu_custom_call.1} parent=5 // pred_region
        %s182 = ssub.s32 %s13, 1
        %s183 = smul.u32 8, %s18
        %p184 = scmp.lt.s32.totalorder %s183, 15
        %s185 = scalar_select %p184, %s183, 15
        %s186 = smul.addr %s185, 8
        %s187 = scalar_lea.vmem %s0, %s186
        %p188 = pneg %p39
        %p189 = pneg %p36
        %s190 = smul.u32 8, %s18
        %p191 = scmp.lt.s32.totalorder %s190, 15
        %s192 = scalar_select %p191, %s190, 15
        %s193 = smul.addr %s192, 8
        %s194 = scalar_lea.vmem %s1, %s193
        %p195 = pneg %p65
        %p196 = pneg %p62
        %p197 = pneg %p86
        %p198 = pneg %p83
        %p199 = pneg %p107
        %p200 = pneg %p104
        %p201 = pneg %p133
        %p202 = pneg %p130
        %s203 = sand.u32 %s120, 1
        %s204 = scalar_lea.sflag [#allocation3], %s203
        %s205 = sand.u32 %s120, 1
        %s206 = smul.addr %s205, 8
        %s207 = scalar_lea.vmem [#allocation2], %s206
        %s208 = smul.u32 8, %s18
        %p209 = scmp.lt.s32.totalorder %s208, 15
        %s210 = scalar_select %p209, %s208, 15
        %s211 = smul.addr %s210, 8
        %s212 = scalar_lea.vmem %s0, %s211
        %s213 = smul.u32 8, %s18
        %s214 = smul.u32 8, %s18
        %p215 = scmp.lt.s32.totalorder %s214, 15
        %s216 = scalar_select %p215, %s214, 15
        %s217 = smul.addr %s216, 8
        %s218 = scalar_lea.vmem %s1, %s217
        %s219 = smul.u32 8, %s18
        %v220 = vld [vmem:[%s212] sm:$0xff]
        %v221 = vld [vmem:[%s212 + $0x8] sm:$0xff]
        %v222 = vld [vmem:[%s212 + $0x10] sm:$0xff]
        %v223 = vld [vmem:[%s212 + $0x18] sm:$0xff]
        %v224 = vld [vmem:[%s212 + $0x20] sm:$0xff]
        %v225 = vld [vmem:[%s212 + $0x28] sm:$0xff]
        %v226 = vld [vmem:[%s212 + $0x30] sm:$0xff]
        %v227 = vld [vmem:[%s212 + $0x38] sm:$0xff]
        %v228 = vld [vmem:[%s218] sm:$0xff]
        %v229 = vld [vmem:[%s218 + $0x8] sm:$0xff]
        %v230 = vld [vmem:[%s218 + $0x10] sm:$0xff]
        %v231 = vld [vmem:[%s218 + $0x18] sm:$0xff]
        %v232 = vld [vmem:[%s218 + $0x20] sm:$0xff]
        %v233 = vld [vmem:[%s218 + $0x28] sm:$0xff]
        %v234 = vld [vmem:[%s218 + $0x30] sm:$0xff]
        %v235 = vld [vmem:[%s218 + $0x38] sm:$0xff]
        %v236 = vld [vmem:[%s2] sm:$0xff]
        %v237 = vld [vmem:[%s2 + $0x8] sm:$0xff]
        %v238 = vld [vmem:[%s3] sm:$0xff]
        %v239 = vld [vmem:[%s3 + $0x8] sm:$0xff]
        %v240 = vld [vmem:[%s3 + $0x10] sm:$0xff]
        %v241 = vld [vmem:[%s3 + $0x18] sm:$0xff]
        %v242 = vld [vmem:[%s3 + $0x20] sm:$0xff]
        %v243 = vld [vmem:[%s3 + $0x28] sm:$0xff]
        %v244 = vld [vmem:[%s3 + $0x30] sm:$0xff]
        %v245 = vld [vmem:[%s3 + $0x38] sm:$0xff]
        %vm246 = vcmask 130048
        %v248 = vsel %vm246, %v220, 0
        %v251 = vsel %vm246, %v221, 0
        %v254 = vsel %vm246, %v222, 0
        %v257 = vsel %vm246, %v223, 0
        %v260 = vsel %vm246, %v224, 0
        %v263 = vsel %vm246, %v225, 0
        %v266 = vsel %vm246, %v226, 0
        %v269 = vsel %vm246, %v227, 0
        %271 = vmatprep.subr.mxu0 0.0
        %272 = vmatpush1.msra.mxu0 %v236
        %273 = vmatprep.subr.mxu0 0.0
        %274 = vmatpush1.msra.mxu0 %v237
        %275 = vmatprep.subr.mxu0 0.0
        %276 = vmatpush1.msra.mxu0 0.0
        %277 = vmatprep.subr.mxu0 0.0
        %278 = vmatpush1.msra.mxu0 0.0
        %279 = vmatprep.subr.mxu0 0.0
        %280 = vmatpush1.msra.mxu0 0.0
        %281 = vmatprep.subr.mxu0 0.0
        %282 = vmatpush1.msra.mxu0 0.0
        %283 = vmatprep.subr.mxu0 0.0
        %284 = vmatpush1.msra.mxu0 0.0
        %285 = vmatprep.subr.mxu0 0.0
        %286 = vmatpush1.msra.mxu0 0.0
        %287 = vmatprep.subr.mxu0 0.0
        %288 = vmatpush1.msra.mxu0 0.0
        %289 = vmatprep.subr.mxu0 0.0
        %290 = vmatpush1.msra.mxu0 0.0
        %291 = vmatprep.subr.mxu0 0.0
        %292 = vmatpush1.msra.mxu0 0.0
        %293 = vmatprep.subr.mxu0 0.0
        %294 = vmatpush1.msra.mxu0 0.0
        %295 = vmatprep.subr.mxu0 0.0
        %296 = vmatpush1.msra.mxu0 0.0
        %297 = vmatprep.subr.mxu0 0.0
        %298 = vmatpush1.msra.mxu0 0.0
        %299 = vmatprep.subr.mxu0 0.0
        %300 = vmatpush1.msra.mxu0 0.0
        %301 = vmatprep.subr.mxu0 0.0
        %302 = vmatpush1.msra.mxu0 0.0
        %303 = vmatprep.subr.mxu0 0.0
        %304 = vmatpush1.msra.mxu0 0.0
        %305 = vmatprep.subr.mxu0 0.0
        %306 = vmatpush1.msra.mxu0 0.0
        %307 = vmatprep.subr.mxu0 0.0
        %308 = vmatpush1.msra.mxu0 0.0
        %309 = vmatprep.subr.mxu0 0.0
        %310 = vmatpush1.msra.mxu0 0.0
        %311 = vmatprep.subr.mxu0 0.0
        %312 = vmatpush1.msra.mxu0 0.0
        %313 = vmatprep.subr.mxu0 0.0
        %314 = vmatpush1.msra.mxu0 0.0
        %315 = vmatprep.subr.mxu0 0.0
        %316 = vmatpush1.msra.mxu0 0.0
        %317 = vmatprep.subr.mxu0 0.0
        %318 = vmatpush1.msra.mxu0 0.0
        %319 = vmatprep.subr.mxu0 0.0
        %320 = vmatpush1.msra.mxu0 0.0
        %321 = vmatprep.subr.mxu0 0.0
        %322 = vmatpush1.msra.mxu0 0.0
        %323 = vmatprep.subr.mxu0 0.0
        %324 = vmatpush1.msra.mxu0 0.0
        %325 = vmatprep.subr.mxu0 0.0
        %326 = vmatpush1.msra.mxu0 0.0
        %327 = vmatprep.subr.mxu0 0.0
        %328 = vmatpush1.msra.mxu0 0.0
        %329 = vmatprep.subr.mxu0 0.0
        %330 = vmatpush1.msra.mxu0 0.0
        %331 = vmatprep.subr.mxu0 0.0
        %332 = vmatpush1.msra.mxu0 0.0
        %333 = vmatprep.subr.mxu0 0.0
        %334 = vmatpush1.msra.mxu0 0.0
        %335 = vmatprep.mubr.f32.mxu0 0.0
        %336 = vmatmul.mubr.f32.gmra.mrb[0].mxu0 %v248
        %v337 = vpop.f32.mrb[0].mxu0
        %v338 = vadd.f32 0.0, %v337
        %v339 = vpop.f32.mrb[0].mxu0
        %340 = vmatprep.mubr.f32.mxu0 0.0
        %341 = vmatmul.mubr.f32.gmra.mrb[0].mxu0 %v251
        %v342 = vpop.f32.mrb[0].mxu0
        %v343 = vadd.f32 0.0, %v342
        %v344 = vpop.f32.mrb[0].mxu0
        %345 = vmatprep.mubr.f32.mxu0 0.0
        %346 = vmatmul.mubr.f32.gmra.mrb[0].mxu0 %v254
        %v347 = vpop.f32.mrb[0].mxu0
        %v348 = vadd.f32 0.0, %v347
        %v349 = vpop.f32.mrb[0].mxu0
        %350 = vmatprep.mubr.f32.mxu0 0.0
        %351 = vmatmul.mubr.f32.gmra.mrb[0].mxu0 %v257
        %v352 = vpop.f32.mrb[0].mxu0
        %v353 = vadd.f32 0.0, %v352
        %v354 = vpop.f32.mrb[0].mxu0
        %355 = vmatprep.mubr.f32.mxu0 0.0
        %356 = vmatmul.mubr.f32.gmra.mrb[0].mxu0 %v260
        %v357 = vpop.f32.mrb[0].mxu0
        %v358 = vadd.f32 0.0, %v357
        %v359 = vpop.f32.mrb[0].mxu0
        %360 = vmatprep.mubr.f32.mxu0 0.0
        %361 = vmatmul.mubr.f32.gmra.mrb[0].mxu0 %v263
        %v362 = vpop.f32.mrb[0].mxu0
        %v363 = vadd.f32 0.0, %v362
        %v364 = vpop.f32.mrb[0].mxu0
        %365 = vmatprep.mubr.f32.mxu0 0.0
        %366 = vmatmul.mubr.f32.gmra.mrb[0].mxu0 %v266
        %v367 = vpop.f32.mrb[0].mxu0
        %v368 = vadd.f32 0.0, %v367
        %v369 = vpop.f32.mrb[0].mxu0
        %370 = vmatprep.mubr.f32.mxu0 0.0
        %371 = vmatmul.mubr.f32.gmra.mrb[0].mxu0 %v269
        %v372 = vpop.f32.mrb[0].mxu0
        %v373 = vadd.f32 0.0, %v372
        %v374 = vpop.f32.mrb[0].mxu0
        %375 = vdwg.mxu0
        %v377 = vsel %vm246, %v228, 0
        %v380 = vsel %vm246, %v229, 0
        %v383 = vsel %vm246, %v230, 0
        %v386 = vsel %vm246, %v231, 0
        %v389 = vsel %vm246, %v232, 0
        %v392 = vsel %vm246, %v233, 0
        %v395 = vsel %vm246, %v234, 0
        %v398 = vsel %vm246, %v235, 0
        %400 = vmatprep.subr.mxu0 0.0
        %401 = vmatpush1.msra.mxu0 %v236
        %402 = vmatprep.subr.mxu0 0.0
        %403 = vmatpush1.msra.mxu0 %v237
        %404 = vmatprep.subr.mxu0 0.0
        %405 = vmatpush1.msra.mxu0 0.0
        %406 = vmatprep.subr.mxu0 0.0
        %407 = vmatpush1.msra.mxu0 0.0
        %408 = vmatprep.subr.mxu0 0.0
        %409 = vmatpush1.msra.mxu0 0.0
        %410 = vmatprep.subr.mxu0 0.0
        %411 = vmatpush1.msra.mxu0 0.0
        %412 = vmatprep.subr.mxu0 0.0
        %413 = vmatpush1.msra.mxu0 0.0
        %414 = vmatprep.subr.mxu0 0.0
        %415 = vmatpush1.msra.mxu0 0.0
        %416 = vmatprep.subr.mxu0 0.0
        %417 = vmatpush1.msra.mxu0 0.0
        %418 = vmatprep.subr.mxu0 0.0
        %419 = vmatpush1.msra.mxu0 0.0
        %420 = vmatprep.subr.mxu0 0.0
        %421 = vmatpush1.msra.mxu0 0.0
        %422 = vmatprep.subr.mxu0 0.0
        %423 = vmatpush1.msra.mxu0 0.0
        %424 = vmatprep.subr.mxu0 0.0
        %425 = vmatpush1.msra.mxu0 0.0
        %426 = vmatprep.subr.mxu0 0.0
        %427 = vmatpush1.msra.mxu0 0.0
        %428 = vmatprep.subr.mxu0 0.0
        %429 = vmatpush1.msra.mxu0 0.0
        %430 = vmatprep.subr.mxu0 0.0
        %431 = vmatpush1.msra.mxu0 0.0
        %432 = vmatprep.subr.mxu0 0.0
        %433 = vmatpush1.msra.mxu0 0.0
        %434 = vmatprep.subr.mxu0 0.0
        %435 = vmatpush1.msra.mxu0 0.0
        %436 = vmatprep.subr.mxu0 0.0
        %437 = vmatpush1.msra.mxu0 0.0
        %438 = vmatprep.subr.mxu0 0.0
        %439 = vmatpush1.msra.mxu0 0.0
        %440 = vmatprep.subr.mxu0 0.0
        %441 = vmatpush1.msra.mxu0 0.0
        %442 = vmatprep.subr.mxu0 0.0
        %443 = vmatpush1.msra.mxu0 0.0
        %444 = vmatprep.subr.mxu0 0.0
        %445 = vmatpush1.msra.mxu0 0.0
        %446 = vmatprep.subr.mxu0 0.0
        %447 = vmatpush1.msra.mxu0 0.0
        %448 = vmatprep.subr.mxu0 0.0
        %449 = vmatpush1.msra.mxu0 0.0
        %450 = vmatprep.subr.mxu0 0.0
        %451 = vmatpush1.msra.mxu0 0.0
        %452 = vmatprep.subr.mxu0 0.0
        %453 = vmatpush1.msra.mxu0 0.0
        %454 = vmatprep.subr.mxu0 0.0
        %455 = vmatpush1.msra.mxu0 0.0
        %456 = vmatprep.subr.mxu0 0.0
        %457 = vmatpush1.msra.mxu0 0.0
        %458 = vmatprep.subr.mxu0 0.0
        %459 = vmatpush1.msra.mxu0 0.0
        %460 = vmatprep.subr.mxu0 0.0
        %461 = vmatpush1.msra.mxu0 0.0
        %462 = vmatprep.subr.mxu0 0.0
        %463 = vmatpush1.msra.mxu0 0.0
        %464 = vmatprep.mubr.f32.mxu0 0.0
        %465 = vmatmul.mubr.f32.gmra.mrb[0].mxu0 %v377
        %v466 = vpop.f32.mrb[0].mxu0
        %v467 = vadd.f32 0.0, %v466
        %v468 = vpop.f32.mrb[0].mxu0
        %469 = vmatprep.mubr.f32.mxu0 0.0
        %470 = vmatmul.mubr.f32.gmra.mrb[0].mxu0 %v380
        %v471 = vpop.f32.mrb[0].mxu0
        %v472 = vadd.f32 0.0, %v471
        %v473 = vpop.f32.mrb[0].mxu0
        %474 = vmatprep.mubr.f32.mxu0 0.0
        %475 = vmatmul.mubr.f32.gmra.mrb[0].mxu0 %v383
        %v476 = vpop.f32.mrb[0].mxu0
        %v477 = vadd.f32 0.0, %v476
        %v478 = vpop.f32.mrb[0].mxu0
        %479 = vmatprep.mubr.f32.mxu0 0.0
        %480 = vmatmul.mubr.f32.gmra.mrb[0].mxu0 %v386
        %v481 = vpop.f32.mrb[0].mxu0
        %v482 = vadd.f32 0.0, %v481
        %v483 = vpop.f32.mrb[0].mxu0
        %484 = vmatprep.mubr.f32.mxu0 0.0
        %485 = vmatmul.mubr.f32.gmra.mrb[0].mxu0 %v389
        %v486 = vpop.f32.mrb[0].mxu0
        %v487 = vadd.f32 0.0, %v486
        %v488 = vpop.f32.mrb[0].mxu0
        %489 = vmatprep.mubr.f32.mxu0 0.0
        %490 = vmatmul.mubr.f32.gmra.mrb[0].mxu0 %v392
        %v491 = vpop.f32.mrb[0].mxu0
        %v492 = vadd.f32 0.0, %v491
        %v493 = vpop.f32.mrb[0].mxu0
        %494 = vmatprep.mubr.f32.mxu0 0.0
        %495 = vmatmul.mubr.f32.gmra.mrb[0].mxu0 %v395
        %v496 = vpop.f32.mrb[0].mxu0
        %v497 = vadd.f32 0.0, %v496
        %v498 = vpop.f32.mrb[0].mxu0
        %499 = vmatprep.mubr.f32.mxu0 0.0
        %500 = vmatmul.mubr.f32.gmra.mrb[0].mxu0 %v398
        %v501 = vpop.f32.mrb[0].mxu0
        %v502 = vadd.f32 0.0, %v501
        %v503 = vpop.f32.mrb[0].mxu0
        %504 = vdwg.mxu0
        %v505 = vmul.f32 %v220, %v220
        %v506 = vmul.f32 %v221, %v221
        %v507 = vmul.f32 %v222, %v222
        %v508 = vmul.f32 %v223, %v223
        %v509 = vmul.f32 %v224, %v224
        %v510 = vmul.f32 %v225, %v225
        %v511 = vmul.f32 %v226, %v226
        %v512 = vmul.f32 %v227, %v227
        %v514 = vsel %vm246, %v505, 0
        %v517 = vsel %vm246, %v506, 0
        %v520 = vsel %vm246, %v507, 0
        %v523 = vsel %vm246, %v508, 0
        %v526 = vsel %vm246, %v509, 0
        %v529 = vsel %vm246, %v510, 0
        %v532 = vsel %vm246, %v511, 0
        %v535 = vsel %vm246, %v512, 0
        %537 = vmatprep.subr.mxu0 0.0
        %538 = vmatpush1.msra.mxu0 %v236
        %539 = vmatprep.subr.mxu0 0.0
        %540 = vmatpush1.msra.mxu0 %v237
        %541 = vmatprep.subr.mxu0 0.0
        %542 = vmatpush1.msra.mxu0 0.0
        %543 = vmatprep.subr.mxu0 0.0
        %544 = vmatpush1.msra.mxu0 0.0
        %545 = vmatprep.subr.mxu0 0.0
        %546 = vmatpush1.msra.mxu0 0.0
        %547 = vmatprep.subr.mxu0 0.0
        %548 = vmatpush1.msra.mxu0 0.0
        %549 = vmatprep.subr.mxu0 0.0
        %550 = vmatpush1.msra.mxu0 0.0
        %551 = vmatprep.subr.mxu0 0.0
        %552 = vmatpush1.msra.mxu0 0.0
        %553 = vmatprep.subr.mxu0 0.0
        %554 = vmatpush1.msra.mxu0 0.0
        %555 = vmatprep.subr.mxu0 0.0
        %556 = vmatpush1.msra.mxu0 0.0
        %557 = vmatprep.subr.mxu0 0.0
        %558 = vmatpush1.msra.mxu0 0.0
        %559 = vmatprep.subr.mxu0 0.0
        %560 = vmatpush1.msra.mxu0 0.0
        %561 = vmatprep.subr.mxu0 0.0
        %562 = vmatpush1.msra.mxu0 0.0
        %563 = vmatprep.subr.mxu0 0.0
        %564 = vmatpush1.msra.mxu0 0.0
        %565 = vmatprep.subr.mxu0 0.0
        %566 = vmatpush1.msra.mxu0 0.0
        %567 = vmatprep.subr.mxu0 0.0
        %568 = vmatpush1.msra.mxu0 0.0
        %569 = vmatprep.subr.mxu0 0.0
        %570 = vmatpush1.msra.mxu0 0.0
        %571 = vmatprep.subr.mxu0 0.0
        %572 = vmatpush1.msra.mxu0 0.0
        %573 = vmatprep.subr.mxu0 0.0
        %574 = vmatpush1.msra.mxu0 0.0
        %575 = vmatprep.subr.mxu0 0.0
        %576 = vmatpush1.msra.mxu0 0.0
        %577 = vmatprep.subr.mxu0 0.0
        %578 = vmatpush1.msra.mxu0 0.0
        %579 = vmatprep.subr.mxu0 0.0
        %580 = vmatpush1.msra.mxu0 0.0
        %581 = vmatprep.subr.mxu0 0.0
        %582 = vmatpush1.msra.mxu0 0.0
        %583 = vmatprep.subr.mxu0 0.0
        %584 = vmatpush1.msra.mxu0 0.0
        %585 = vmatprep.subr.mxu0 0.0
        %586 = vmatpush1.msra.mxu0 0.0
        %587 = vmatprep.subr.mxu0 0.0
        %588 = vmatpush1.msra.mxu0 0.0
        %589 = vmatprep.subr.mxu0 0.0
        %590 = vmatpush1.msra.mxu0 0.0
        %591 = vmatprep.subr.mxu0 0.0
        %592 = vmatpush1.msra.mxu0 0.0
        %593 = vmatprep.subr.mxu0 0.0
        %594 = vmatpush1.msra.mxu0 0.0
        %595 = vmatprep.subr.mxu0 0.0
        %596 = vmatpush1.msra.mxu0 0.0
        %597 = vmatprep.subr.mxu0 0.0
        %598 = vmatpush1.msra.mxu0 0.0
        %599 = vmatprep.subr.mxu0 0.0
        %600 = vmatpush1.msra.mxu0 0.0
        %601 = vmatprep.mubr.f32.mxu0 0.0
        %602 = vmatmul.mubr.f32.gmra.mrb[0].mxu0 %v514
        %v603 = vpop.f32.mrb[0].mxu0
        %v604 = vadd.f32 0.0, %v603
        %v605 = vpop.f32.mrb[0].mxu0
        %606 = vmatprep.mubr.f32.mxu0 0.0
        %607 = vmatmul.mubr.f32.gmra.mrb[0].mxu0 %v517
        %v608 = vpop.f32.mrb[0].mxu0
        %v609 = vadd.f32 0.0, %v608
        %v610 = vpop.f32.mrb[0].mxu0
        %611 = vmatprep.mubr.f32.mxu0 0.0
        %612 = vmatmul.mubr.f32.gmra.mrb[0].mxu0 %v520
        %v613 = vpop.f32.mrb[0].mxu0
        %v614 = vadd.f32 0.0, %v613
        %v615 = vpop.f32.mrb[0].mxu0
        %616 = vmatprep.mubr.f32.mxu0 0.0
        %617 = vmatmul.mubr.f32.gmra.mrb[0].mxu0 %v523
        %v618 = vpop.f32.mrb[0].mxu0
        %v619 = vadd.f32 0.0, %v618
        %v620 = vpop.f32.mrb[0].mxu0
        %621 = vmatprep.mubr.f32.mxu0 0.0
        %622 = vmatmul.mubr.f32.gmra.mrb[0].mxu0 %v526
        %v623 = vpop.f32.mrb[0].mxu0
        %v624 = vadd.f32 0.0, %v623
        %v625 = vpop.f32.mrb[0].mxu0
        %626 = vmatprep.mubr.f32.mxu0 0.0
        %627 = vmatmul.mubr.f32.gmra.mrb[0].mxu0 %v529
        %v628 = vpop.f32.mrb[0].mxu0
        %v629 = vadd.f32 0.0, %v628
        %v630 = vpop.f32.mrb[0].mxu0
        %631 = vmatprep.mubr.f32.mxu0 0.0
        %632 = vmatmul.mubr.f32.gmra.mrb[0].mxu0 %v532
        %v633 = vpop.f32.mrb[0].mxu0
        %v634 = vadd.f32 0.0, %v633
        %v635 = vpop.f32.mrb[0].mxu0
        %636 = vmatprep.mubr.f32.mxu0 0.0
        %637 = vmatmul.mubr.f32.gmra.mrb[0].mxu0 %v535
        %v638 = vpop.f32.mrb[0].mxu0
        %v639 = vadd.f32 0.0, %v638
        %v640 = vpop.f32.mrb[0].mxu0
        %641 = vdwg.mxu0
        %v642 = vmul.f32 %v228, %v228
        %v643 = vmul.f32 %v229, %v229
        %v644 = vmul.f32 %v230, %v230
        %v645 = vmul.f32 %v231, %v231
        %v646 = vmul.f32 %v232, %v232
        %v647 = vmul.f32 %v233, %v233
        %v648 = vmul.f32 %v234, %v234
        %v649 = vmul.f32 %v235, %v235
        %v651 = vsel %vm246, %v642, 0
        %v654 = vsel %vm246, %v643, 0
        %v657 = vsel %vm246, %v644, 0
        %v660 = vsel %vm246, %v645, 0
        %v663 = vsel %vm246, %v646, 0
        %v666 = vsel %vm246, %v647, 0
        %v669 = vsel %vm246, %v648, 0
        %v672 = vsel %vm246, %v649, 0
        %674 = vmatprep.subr.mxu0 0.0
        %675 = vmatpush1.msra.mxu0 %v236
        %676 = vmatprep.subr.mxu0 0.0
        %677 = vmatpush1.msra.mxu0 %v237
        %678 = vmatprep.subr.mxu0 0.0
        %679 = vmatpush1.msra.mxu0 0.0
        %680 = vmatprep.subr.mxu0 0.0
        %681 = vmatpush1.msra.mxu0 0.0
        %682 = vmatprep.subr.mxu0 0.0
        %683 = vmatpush1.msra.mxu0 0.0
        %684 = vmatprep.subr.mxu0 0.0
        %685 = vmatpush1.msra.mxu0 0.0
        %686 = vmatprep.subr.mxu0 0.0
        %687 = vmatpush1.msra.mxu0 0.0
        %688 = vmatprep.subr.mxu0 0.0
        %689 = vmatpush1.msra.mxu0 0.0
        %690 = vmatprep.subr.mxu0 0.0
        %691 = vmatpush1.msra.mxu0 0.0
        %692 = vmatprep.subr.mxu0 0.0
        %693 = vmatpush1.msra.mxu0 0.0
        %694 = vmatprep.subr.mxu0 0.0
        %695 = vmatpush1.msra.mxu0 0.0
        %696 = vmatprep.subr.mxu0 0.0
        %697 = vmatpush1.msra.mxu0 0.0
        %698 = vmatprep.subr.mxu0 0.0
        %699 = vmatpush1.msra.mxu0 0.0
        %700 = vmatprep.subr.mxu0 0.0
        %701 = vmatpush1.msra.mxu0 0.0
        %702 = vmatprep.subr.mxu0 0.0
        %703 = vmatpush1.msra.mxu0 0.0
        %704 = vmatprep.subr.mxu0 0.0
        %705 = vmatpush1.msra.mxu0 0.0
        %706 = vmatprep.subr.mxu0 0.0
        %707 = vmatpush1.msra.mxu0 0.0
        %708 = vmatprep.subr.mxu0 0.0
        %709 = vmatpush1.msra.mxu0 0.0
        %710 = vmatprep.subr.mxu0 0.0
        %711 = vmatpush1.msra.mxu0 0.0
        %712 = vmatprep.subr.mxu0 0.0
        %713 = vmatpush1.msra.mxu0 0.0
        %714 = vmatprep.subr.mxu0 0.0
        %715 = vmatpush1.msra.mxu0 0.0
        %716 = vmatprep.subr.mxu0 0.0
        %717 = vmatpush1.msra.mxu0 0.0
        %718 = vmatprep.subr.mxu0 0.0
        %719 = vmatpush1.msra.mxu0 0.0
        %720 = vmatprep.subr.mxu0 0.0
        %721 = vmatpush1.msra.mxu0 0.0
        %722 = vmatprep.subr.mxu0 0.0
        %723 = vmatpush1.msra.mxu0 0.0
        %724 = vmatprep.subr.mxu0 0.0
        %725 = vmatpush1.msra.mxu0 0.0
        %726 = vmatprep.subr.mxu0 0.0
        %727 = vmatpush1.msra.mxu0 0.0
        %728 = vmatprep.subr.mxu0 0.0
        %729 = vmatpush1.msra.mxu0 0.0
        %730 = vmatprep.subr.mxu0 0.0
        %731 = vmatpush1.msra.mxu0 0.0
        %732 = vmatprep.subr.mxu0 0.0
        %733 = vmatpush1.msra.mxu0 0.0
        %734 = vmatprep.subr.mxu0 0.0
        %735 = vmatpush1.msra.mxu0 0.0
        %736 = vmatprep.subr.mxu0 0.0
        %737 = vmatpush1.msra.mxu0 0.0
        %738 = vmatprep.mubr.f32.mxu0 0.0
        %739 = vmatmul.mubr.f32.gmra.mrb[0].mxu0 %v651
        %v740 = vpop.f32.mrb[0].mxu0
        %v741 = vadd.f32 0.0, %v740
        %v742 = vpop.f32.mrb[0].mxu0
        %743 = vmatprep.mubr.f32.mxu0 0.0
        %744 = vmatmul.mubr.f32.gmra.mrb[0].mxu0 %v654
        %v745 = vpop.f32.mrb[0].mxu0
        %v746 = vadd.f32 0.0, %v745
        %v747 = vpop.f32.mrb[0].mxu0
        %748 = vmatprep.mubr.f32.mxu0 0.0
        %749 = vmatmul.mubr.f32.gmra.mrb[0].mxu0 %v657
        %v750 = vpop.f32.mrb[0].mxu0
        %v751 = vadd.f32 0.0, %v750
        %v752 = vpop.f32.mrb[0].mxu0
        %753 = vmatprep.mubr.f32.mxu0 0.0
        %754 = vmatmul.mubr.f32.gmra.mrb[0].mxu0 %v660
        %v755 = vpop.f32.mrb[0].mxu0
        %v756 = vadd.f32 0.0, %v755
        %v757 = vpop.f32.mrb[0].mxu0
        %758 = vmatprep.mubr.f32.mxu0 0.0
        %759 = vmatmul.mubr.f32.gmra.mrb[0].mxu0 %v663
        %v760 = vpop.f32.mrb[0].mxu0
        %v761 = vadd.f32 0.0, %v760
        %v762 = vpop.f32.mrb[0].mxu0
        %763 = vmatprep.mubr.f32.mxu0 0.0
        %764 = vmatmul.mubr.f32.gmra.mrb[0].mxu0 %v666
        %v765 = vpop.f32.mrb[0].mxu0
        %v766 = vadd.f32 0.0, %v765
        %v767 = vpop.f32.mrb[0].mxu0
        %768 = vmatprep.mubr.f32.mxu0 0.0
        %769 = vmatmul.mubr.f32.gmra.mrb[0].mxu0 %v669
        %v770 = vpop.f32.mrb[0].mxu0
        %v771 = vadd.f32 0.0, %v770
        %v772 = vpop.f32.mrb[0].mxu0
        %773 = vmatprep.mubr.f32.mxu0 0.0
        %774 = vmatmul.mubr.f32.gmra.mrb[0].mxu0 %v672
        %v775 = vpop.f32.mrb[0].mxu0
        %v776 = vadd.f32 0.0, %v775
        %v777 = vpop.f32.mrb[0].mxu0
        %778 = vdwg.mxu0
        %v779 = vmul.f32 %v220, %v228
        %v780 = vmul.f32 %v221, %v229
        %v781 = vmul.f32 %v222, %v230
        %v782 = vmul.f32 %v223, %v231
        %v783 = vmul.f32 %v224, %v232
        %v784 = vmul.f32 %v225, %v233
        %v785 = vmul.f32 %v226, %v234
        %v786 = vmul.f32 %v227, %v235
        %v788 = vsel %vm246, %v779, 0
        %v791 = vsel %vm246, %v780, 0
        %v794 = vsel %vm246, %v781, 0
        %v797 = vsel %vm246, %v782, 0
        %v800 = vsel %vm246, %v783, 0
        %v803 = vsel %vm246, %v784, 0
        %v806 = vsel %vm246, %v785, 0
        %v809 = vsel %vm246, %v786, 0
        %811 = vmatprep.subr.mxu0 0.0
        %812 = vmatpush1.msra.mxu0 %v236
        %813 = vmatprep.subr.mxu0 0.0
        %814 = vmatpush1.msra.mxu0 %v237
        %815 = vmatprep.subr.mxu0 0.0
        %816 = vmatpush1.msra.mxu0 0.0
        %817 = vmatprep.subr.mxu0 0.0
        %818 = vmatpush1.msra.mxu0 0.0
        %819 = vmatprep.subr.mxu0 0.0
        %820 = vmatpush1.msra.mxu0 0.0
        %821 = vmatprep.subr.mxu0 0.0
        %822 = vmatpush1.msra.mxu0 0.0
        %823 = vmatprep.subr.mxu0 0.0
        %824 = vmatpush1.msra.mxu0 0.0
        %825 = vmatprep.subr.mxu0 0.0
        %826 = vmatpush1.msra.mxu0 0.0
        %827 = vmatprep.subr.mxu0 0.0
        %828 = vmatpush1.msra.mxu0 0.0
        %829 = vmatprep.subr.mxu0 0.0
        %830 = vmatpush1.msra.mxu0 0.0
        %831 = vmatprep.subr.mxu0 0.0
        %832 = vmatpush1.msra.mxu0 0.0
        %833 = vmatprep.subr.mxu0 0.0
        %834 = vmatpush1.msra.mxu0 0.0
        %835 = vmatprep.subr.mxu0 0.0
        %836 = vmatpush1.msra.mxu0 0.0
        %837 = vmatprep.subr.mxu0 0.0
        %838 = vmatpush1.msra.mxu0 0.0
        %839 = vmatprep.subr.mxu0 0.0
        %840 = vmatpush1.msra.mxu0 0.0
        %841 = vmatprep.subr.mxu0 0.0
        %842 = vmatpush1.msra.mxu0 0.0
        %843 = vmatprep.subr.mxu0 0.0
        %844 = vmatpush1.msra.mxu0 0.0
        %845 = vmatprep.subr.mxu0 0.0
        %846 = vmatpush1.msra.mxu0 0.0
        %847 = vmatprep.subr.mxu0 0.0
        %848 = vmatpush1.msra.mxu0 0.0
        %849 = vmatprep.subr.mxu0 0.0
        %850 = vmatpush1.msra.mxu0 0.0
        %851 = vmatprep.subr.mxu0 0.0
        %852 = vmatpush1.msra.mxu0 0.0
        %853 = vmatprep.subr.mxu0 0.0
        %854 = vmatpush1.msra.mxu0 0.0
        %855 = vmatprep.subr.mxu0 0.0
        %856 = vmatpush1.msra.mxu0 0.0
        %857 = vmatprep.subr.mxu0 0.0
        %858 = vmatpush1.msra.mxu0 0.0
        %859 = vmatprep.subr.mxu0 0.0
        %860 = vmatpush1.msra.mxu0 0.0
        %861 = vmatprep.subr.mxu0 0.0
        %862 = vmatpush1.msra.mxu0 0.0
        %863 = vmatprep.subr.mxu0 0.0
        %864 = vmatpush1.msra.mxu0 0.0
        %865 = vmatprep.subr.mxu0 0.0
        %866 = vmatpush1.msra.mxu0 0.0
        %867 = vmatprep.subr.mxu0 0.0
        %868 = vmatpush1.msra.mxu0 0.0
        %869 = vmatprep.subr.mxu0 0.0
        %870 = vmatpush1.msra.mxu0 0.0
        %871 = vmatprep.subr.mxu0 0.0
        %872 = vmatpush1.msra.mxu0 0.0
        %873 = vmatprep.subr.mxu0 0.0
        %874 = vmatpush1.msra.mxu0 0.0
        %875 = vmatprep.mubr.f32.mxu0 0.0
        %876 = vmatmul.mubr.f32.gmra.mrb[0].mxu0 %v788
        %v877 = vpop.f32.mrb[0].mxu0
        %v878 = vadd.f32 0.0, %v877
        %v879 = vpop.f32.mrb[0].mxu0
        %880 = vmatprep.mubr.f32.mxu0 0.0
        %881 = vmatmul.mubr.f32.gmra.mrb[0].mxu0 %v791
        %v882 = vpop.f32.mrb[0].mxu0
        %v883 = vadd.f32 0.0, %v882
        %v884 = vpop.f32.mrb[0].mxu0
        %885 = vmatprep.mubr.f32.mxu0 0.0
        %886 = vmatmul.mubr.f32.gmra.mrb[0].mxu0 %v794
        %v887 = vpop.f32.mrb[0].mxu0
        %v888 = vadd.f32 0.0, %v887
        %v889 = vpop.f32.mrb[0].mxu0
        %890 = vmatprep.mubr.f32.mxu0 0.0
        %891 = vmatmul.mubr.f32.gmra.mrb[0].mxu0 %v797
        %v892 = vpop.f32.mrb[0].mxu0
        %v893 = vadd.f32 0.0, %v892
        %v894 = vpop.f32.mrb[0].mxu0
        %895 = vmatprep.mubr.f32.mxu0 0.0
        %896 = vmatmul.mubr.f32.gmra.mrb[0].mxu0 %v800
        %v897 = vpop.f32.mrb[0].mxu0
        %v898 = vadd.f32 0.0, %v897
        %v899 = vpop.f32.mrb[0].mxu0
        %900 = vmatprep.mubr.f32.mxu0 0.0
        %901 = vmatmul.mubr.f32.gmra.mrb[0].mxu0 %v803
        %v902 = vpop.f32.mrb[0].mxu0
        %v903 = vadd.f32 0.0, %v902
        %v904 = vpop.f32.mrb[0].mxu0
        %905 = vmatprep.mubr.f32.mxu0 0.0
        %906 = vmatmul.mubr.f32.gmra.mrb[0].mxu0 %v806
        %v907 = vpop.f32.mrb[0].mxu0
        %v908 = vadd.f32 0.0, %v907
        %v909 = vpop.f32.mrb[0].mxu0
        %910 = vmatprep.mubr.f32.mxu0 0.0
        %911 = vmatmul.mubr.f32.gmra.mrb[0].mxu0 %v809
        %v912 = vpop.f32.mrb[0].mxu0
        %v913 = vadd.f32 0.0, %v912
        %v914 = vpop.f32.mrb[0].mxu0
        %915 = vdwg.mxu0
        %vm916 = vcmask 523264
        %v918 = vsel %vm916, %v238, 0
        %v921 = vsel %vm916, %v239, 0
        %v924 = vsel %vm916, %v240, 0
        %v927 = vsel %vm916, %v241, 0
        %v930 = vsel %vm916, %v242, 0
        %v933 = vsel %vm916, %v243, 0
        %v936 = vsel %vm916, %v244, 0
        %v939 = vsel %vm916, %v245, 0
        %941 = vmatprep.subr.mxu0 0.0
        %942 = vmatpush1.msra.mxu0 %v338
        %943 = vmatprep.subr.mxu0 0.0
        %944 = vmatpush1.msra.mxu0 %v343
        %945 = vmatprep.subr.mxu0 0.0
        %946 = vmatpush1.msra.mxu0 %v348
        %947 = vmatprep.subr.mxu0 0.0
        %948 = vmatpush1.msra.mxu0 %v353
        %949 = vmatprep.subr.mxu0 0.0
        %950 = vmatpush1.msra.mxu0 %v358
        %951 = vmatprep.subr.mxu0 0.0
        %952 = vmatpush1.msra.mxu0 %v363
        %953 = vmatprep.subr.mxu0 0.0
        %954 = vmatpush1.msra.mxu0 %v368
        %955 = vmatprep.subr.mxu0 0.0
        %956 = vmatpush1.msra.mxu0 %v373
        %957 = vmatprep.subr.mxu0 0.0
        %958 = vmatpush1.msra.mxu0 0.0
        %959 = vmatprep.subr.mxu0 0.0
        %960 = vmatpush1.msra.mxu0 0.0
        %961 = vmatprep.subr.mxu0 0.0
        %962 = vmatpush1.msra.mxu0 0.0
        %963 = vmatprep.subr.mxu0 0.0
        %964 = vmatpush1.msra.mxu0 0.0
        %965 = vmatprep.subr.mxu0 0.0
        %966 = vmatpush1.msra.mxu0 0.0
        %967 = vmatprep.subr.mxu0 0.0
        %968 = vmatpush1.msra.mxu0 0.0
        %969 = vmatprep.subr.mxu0 0.0
        %970 = vmatpush1.msra.mxu0 0.0
        %971 = vmatprep.subr.mxu0 0.0
        %972 = vmatpush1.msra.mxu0 0.0
        %973 = vmatprep.subr.mxu0 0.0
        %974 = vmatpush1.msra.mxu0 0.0
        %975 = vmatprep.subr.mxu0 0.0
        %976 = vmatpush1.msra.mxu0 0.0
        %977 = vmatprep.subr.mxu0 0.0
        %978 = vmatpush1.msra.mxu0 0.0
        %979 = vmatprep.subr.mxu0 0.0
        %980 = vmatpush1.msra.mxu0 0.0
        %981 = vmatprep.subr.mxu0 0.0
        %982 = vmatpush1.msra.mxu0 0.0
        %983 = vmatprep.subr.mxu0 0.0
        %984 = vmatpush1.msra.mxu0 0.0
        %985 = vmatprep.subr.mxu0 0.0
        %986 = vmatpush1.msra.mxu0 0.0
        %987 = vmatprep.subr.mxu0 0.0
        %988 = vmatpush1.msra.mxu0 0.0
        %989 = vmatprep.subr.mxu0 0.0
        %990 = vmatpush1.msra.mxu0 0.0
        %991 = vmatprep.subr.mxu0 0.0
        %992 = vmatpush1.msra.mxu0 0.0
        %993 = vmatprep.subr.mxu0 0.0
        %994 = vmatpush1.msra.mxu0 0.0
        %995 = vmatprep.subr.mxu0 0.0
        %996 = vmatpush1.msra.mxu0 0.0
        %997 = vmatprep.subr.mxu0 0.0
        %998 = vmatpush1.msra.mxu0 0.0
        %999 = vmatprep.subr.mxu0 0.0
        %1000 = vmatpush1.msra.mxu0 0.0
        %1001 = vmatprep.subr.mxu0 0.0
        %1002 = vmatpush1.msra.mxu0 0.0
        %1003 = vmatprep.subr.mxu0 0.0
        %1004 = vmatpush1.msra.mxu0 0.0
        %1005 = vmatprep.mubr.f32.mxu0 0.0
        %1006 = vmatmul.mubr.f32.gmra.mrb[0].mxu0 %v918
        %v1007 = vpop.f32.mrb[0].mxu0
        %v1008 = vadd.f32 0.0, %v1007
        %v1009 = vpop.f32.mrb[0].mxu0
        %1010 = vmatprep.mubr.f32.mxu0 0.0
        %1011 = vmatmul.mubr.f32.gmra.mrb[0].mxu0 %v921
        %v1012 = vpop.f32.mrb[0].mxu0
        %v1013 = vadd.f32 0.0, %v1012
        %v1014 = vpop.f32.mrb[0].mxu0
        %1015 = vmatprep.mubr.f32.mxu0 0.0
        %1016 = vmatmul.mubr.f32.gmra.mrb[0].mxu0 %v924
        %v1017 = vpop.f32.mrb[0].mxu0
        %v1018 = vadd.f32 0.0, %v1017
        %v1019 = vpop.f32.mrb[0].mxu0
        %1020 = vmatprep.mubr.f32.mxu0 0.0
        %1021 = vmatmul.mubr.f32.gmra.mrb[0].mxu0 %v927
        %v1022 = vpop.f32.mrb[0].mxu0
        %v1023 = vadd.f32 0.0, %v1022
        %v1024 = vpop.f32.mrb[0].mxu0
        %1025 = vmatprep.mubr.f32.mxu0 0.0
        %1026 = vmatmul.mubr.f32.gmra.mrb[0].mxu0 %v930
        %v1027 = vpop.f32.mrb[0].mxu0
        %v1028 = vadd.f32 0.0, %v1027
        %v1029 = vpop.f32.mrb[0].mxu0
        %1030 = vmatprep.mubr.f32.mxu0 0.0
        %1031 = vmatmul.mubr.f32.gmra.mrb[0].mxu0 %v933
        %v1032 = vpop.f32.mrb[0].mxu0
        %v1033 = vadd.f32 0.0, %v1032
        %v1034 = vpop.f32.mrb[0].mxu0
        %1035 = vmatprep.mubr.f32.mxu0 0.0
        %1036 = vmatmul.mubr.f32.gmra.mrb[0].mxu0 %v936
        %v1037 = vpop.f32.mrb[0].mxu0
        %v1038 = vadd.f32 0.0, %v1037
        %v1039 = vpop.f32.mrb[0].mxu0
        %1040 = vmatprep.mubr.f32.mxu0 0.0
        %1041 = vmatmul.mubr.f32.gmra.mrb[0].mxu0 %v939
        %v1042 = vpop.f32.mrb[0].mxu0
        %v1043 = vadd.f32 0.0, %v1042
        %v1044 = vpop.f32.mrb[0].mxu0
        %1045 = vdwg.mxu0
        %1046 = vmatprep.subr.mxu0 0.0
        %1047 = vmatpush1.msra.mxu0 %v467
        %1048 = vmatprep.subr.mxu0 0.0
        %1049 = vmatpush1.msra.mxu0 %v472
        %1050 = vmatprep.subr.mxu0 0.0
        %1051 = vmatpush1.msra.mxu0 %v477
        %1052 = vmatprep.subr.mxu0 0.0
        %1053 = vmatpush1.msra.mxu0 %v482
        %1054 = vmatprep.subr.mxu0 0.0
        %1055 = vmatpush1.msra.mxu0 %v487
        %1056 = vmatprep.subr.mxu0 0.0
        %1057 = vmatpush1.msra.mxu0 %v492
        %1058 = vmatprep.subr.mxu0 0.0
        %1059 = vmatpush1.msra.mxu0 %v497
        %1060 = vmatprep.subr.mxu0 0.0
        %1061 = vmatpush1.msra.mxu0 %v502
        %1062 = vmatprep.subr.mxu0 0.0
        %1063 = vmatpush1.msra.mxu0 0.0
        %1064 = vmatprep.subr.mxu0 0.0
        %1065 = vmatpush1.msra.mxu0 0.0
        %1066 = vmatprep.subr.mxu0 0.0
        %1067 = vmatpush1.msra.mxu0 0.0
        %1068 = vmatprep.subr.mxu0 0.0
        %1069 = vmatpush1.msra.mxu0 0.0
        %1070 = vmatprep.subr.mxu0 0.0
        %1071 = vmatpush1.msra.mxu0 0.0
        %1072 = vmatprep.subr.mxu0 0.0
        %1073 = vmatpush1.msra.mxu0 0.0
        %1074 = vmatprep.subr.mxu0 0.0
        %1075 = vmatpush1.msra.mxu0 0.0
        %1076 = vmatprep.subr.mxu0 0.0
        %1077 = vmatpush1.msra.mxu0 0.0
        %1078 = vmatprep.subr.mxu0 0.0
        %1079 = vmatpush1.msra.mxu0 0.0
        %1080 = vmatprep.subr.mxu0 0.0
        %1081 = vmatpush1.msra.mxu0 0.0
        %1082 = vmatprep.subr.mxu0 0.0
        %1083 = vmatpush1.msra.mxu0 0.0
        %1084 = vmatprep.subr.mxu0 0.0
        %1085 = vmatpush1.msra.mxu0 0.0
        %1086 = vmatprep.subr.mxu0 0.0
        %1087 = vmatpush1.msra.mxu0 0.0
        %1088 = vmatprep.subr.mxu0 0.0
        %1089 = vmatpush1.msra.mxu0 0.0
        %1090 = vmatprep.subr.mxu0 0.0
        %1091 = vmatpush1.msra.mxu0 0.0
        %1092 = vmatprep.subr.mxu0 0.0
        %1093 = vmatpush1.msra.mxu0 0.0
        %1094 = vmatprep.subr.mxu0 0.0
        %1095 = vmatpush1.msra.mxu0 0.0
        %1096 = vmatprep.subr.mxu0 0.0
        %1097 = vmatpush1.msra.mxu0 0.0
        %1098 = vmatprep.subr.mxu0 0.0
        %1099 = vmatpush1.msra.mxu0 0.0
        %1100 = vmatprep.subr.mxu0 0.0
        %1101 = vmatpush1.msra.mxu0 0.0
        %1102 = vmatprep.subr.mxu0 0.0
        %1103 = vmatpush1.msra.mxu0 0.0
        %1104 = vmatprep.subr.mxu0 0.0
        %1105 = vmatpush1.msra.mxu0 0.0
        %1106 = vmatprep.subr.mxu0 0.0
        %1107 = vmatpush1.msra.mxu0 0.0
        %1108 = vmatprep.subr.mxu0 0.0
        %1109 = vmatpush1.msra.mxu0 0.0
        %1110 = vmatprep.mubr.f32.mxu0 0.0
        %1111 = vmatmul.mubr.f32.gmra.mrb[0].mxu0 %v918
        %v1112 = vpop.f32.mrb[0].mxu0
        %v1113 = vadd.f32 0.0, %v1112
        %v1114 = vpop.f32.mrb[0].mxu0
        %1115 = vmatprep.mubr.f32.mxu0 0.0
        %1116 = vmatmul.mubr.f32.gmra.mrb[0].mxu0 %v921
        %v1117 = vpop.f32.mrb[0].mxu0
        %v1118 = vadd.f32 0.0, %v1117
        %v1119 = vpop.f32.mrb[0].mxu0
        %1120 = vmatprep.mubr.f32.mxu0 0.0
        %1121 = vmatmul.mubr.f32.gmra.mrb[0].mxu0 %v924
        %v1122 = vpop.f32.mrb[0].mxu0
        %v1123 = vadd.f32 0.0, %v1122
        %v1124 = vpop.f32.mrb[0].mxu0
        %1125 = vmatprep.mubr.f32.mxu0 0.0
        %1126 = vmatmul.mubr.f32.gmra.mrb[0].mxu0 %v927
        %v1127 = vpop.f32.mrb[0].mxu0
        %v1128 = vadd.f32 0.0, %v1127
        %v1129 = vpop.f32.mrb[0].mxu0
        %1130 = vmatprep.mubr.f32.mxu0 0.0
        %1131 = vmatmul.mubr.f32.gmra.mrb[0].mxu0 %v930
        %v1132 = vpop.f32.mrb[0].mxu0
        %v1133 = vadd.f32 0.0, %v1132
        %v1134 = vpop.f32.mrb[0].mxu0
        %1135 = vmatprep.mubr.f32.mxu0 0.0
        %1136 = vmatmul.mubr.f32.gmra.mrb[0].mxu0 %v933
        %v1137 = vpop.f32.mrb[0].mxu0
        %v1138 = vadd.f32 0.0, %v1137
        %v1139 = vpop.f32.mrb[0].mxu0
        %1140 = vmatprep.mubr.f32.mxu0 0.0
        %1141 = vmatmul.mubr.f32.gmra.mrb[0].mxu0 %v936
        %v1142 = vpop.f32.mrb[0].mxu0
        %v1143 = vadd.f32 0.0, %v1142
        %v1144 = vpop.f32.mrb[0].mxu0
        %1145 = vmatprep.mubr.f32.mxu0 0.0
        %1146 = vmatmul.mubr.f32.gmra.mrb[0].mxu0 %v939
        %v1147 = vpop.f32.mrb[0].mxu0
        %v1148 = vadd.f32 0.0, %v1147
        %v1149 = vpop.f32.mrb[0].mxu0
        %1150 = vdwg.mxu0
        %1151 = vmatprep.subr.mxu0 0.0
        %1152 = vmatpush1.msra.mxu0 %v604
        %1153 = vmatprep.subr.mxu0 0.0
        %1154 = vmatpush1.msra.mxu0 %v609
        %1155 = vmatprep.subr.mxu0 0.0
        %1156 = vmatpush1.msra.mxu0 %v614
        %1157 = vmatprep.subr.mxu0 0.0
        %1158 = vmatpush1.msra.mxu0 %v619
        %1159 = vmatprep.subr.mxu0 0.0
        %1160 = vmatpush1.msra.mxu0 %v624
        %1161 = vmatprep.subr.mxu0 0.0
        %1162 = vmatpush1.msra.mxu0 %v629
        %1163 = vmatprep.subr.mxu0 0.0
        %1164 = vmatpush1.msra.mxu0 %v634
        %1165 = vmatprep.subr.mxu0 0.0
        %1166 = vmatpush1.msra.mxu0 %v639
        %1167 = vmatprep.subr.mxu0 0.0
        %1168 = vmatpush1.msra.mxu0 0.0
        %1169 = vmatprep.subr.mxu0 0.0
        %1170 = vmatpush1.msra.mxu0 0.0
        %1171 = vmatprep.subr.mxu0 0.0
        %1172 = vmatpush1.msra.mxu0 0.0
        %1173 = vmatprep.subr.mxu0 0.0
        %1174 = vmatpush1.msra.mxu0 0.0
        %1175 = vmatprep.subr.mxu0 0.0
        %1176 = vmatpush1.msra.mxu0 0.0
        %1177 = vmatprep.subr.mxu0 0.0
        %1178 = vmatpush1.msra.mxu0 0.0
        %1179 = vmatprep.subr.mxu0 0.0
        %1180 = vmatpush1.msra.mxu0 0.0
        %1181 = vmatprep.subr.mxu0 0.0
        %1182 = vmatpush1.msra.mxu0 0.0
        %1183 = vmatprep.subr.mxu0 0.0
        %1184 = vmatpush1.msra.mxu0 0.0
        %1185 = vmatprep.subr.mxu0 0.0
        %1186 = vmatpush1.msra.mxu0 0.0
        %1187 = vmatprep.subr.mxu0 0.0
        %1188 = vmatpush1.msra.mxu0 0.0
        %1189 = vmatprep.subr.mxu0 0.0
        %1190 = vmatpush1.msra.mxu0 0.0
        %1191 = vmatprep.subr.mxu0 0.0
        %1192 = vmatpush1.msra.mxu0 0.0
        %1193 = vmatprep.subr.mxu0 0.0
        %1194 = vmatpush1.msra.mxu0 0.0
        %1195 = vmatprep.subr.mxu0 0.0
        %1196 = vmatpush1.msra.mxu0 0.0
        %1197 = vmatprep.subr.mxu0 0.0
        %1198 = vmatpush1.msra.mxu0 0.0
        %1199 = vmatprep.subr.mxu0 0.0
        %1200 = vmatpush1.msra.mxu0 0.0
        %1201 = vmatprep.subr.mxu0 0.0
        %1202 = vmatpush1.msra.mxu0 0.0
        %1203 = vmatprep.subr.mxu0 0.0
        %1204 = vmatpush1.msra.mxu0 0.0
        %1205 = vmatprep.subr.mxu0 0.0
        %1206 = vmatpush1.msra.mxu0 0.0
        %1207 = vmatprep.subr.mxu0 0.0
        %1208 = vmatpush1.msra.mxu0 0.0
        %1209 = vmatprep.subr.mxu0 0.0
        %1210 = vmatpush1.msra.mxu0 0.0
        %1211 = vmatprep.subr.mxu0 0.0
        %1212 = vmatpush1.msra.mxu0 0.0
        %1213 = vmatprep.subr.mxu0 0.0
        %1214 = vmatpush1.msra.mxu0 0.0
        %1215 = vmatprep.mubr.f32.mxu0 0.0
        %1216 = vmatmul.mubr.f32.gmra.mrb[0].mxu0 %v918
        %v1217 = vpop.f32.mrb[0].mxu0
        %v1218 = vadd.f32 0.0, %v1217
        %v1219 = vpop.f32.mrb[0].mxu0
        %1220 = vmatprep.mubr.f32.mxu0 0.0
        %1221 = vmatmul.mubr.f32.gmra.mrb[0].mxu0 %v921
        %v1222 = vpop.f32.mrb[0].mxu0
        %v1223 = vadd.f32 0.0, %v1222
        %v1224 = vpop.f32.mrb[0].mxu0
        %1225 = vmatprep.mubr.f32.mxu0 0.0
        %1226 = vmatmul.mubr.f32.gmra.mrb[0].mxu0 %v924
        %v1227 = vpop.f32.mrb[0].mxu0
        %v1228 = vadd.f32 0.0, %v1227
        %v1229 = vpop.f32.mrb[0].mxu0
        %1230 = vmatprep.mubr.f32.mxu0 0.0
        %1231 = vmatmul.mubr.f32.gmra.mrb[0].mxu0 %v927
        %v1232 = vpop.f32.mrb[0].mxu0
        %v1233 = vadd.f32 0.0, %v1232
        %v1234 = vpop.f32.mrb[0].mxu0
        %1235 = vmatprep.mubr.f32.mxu0 0.0
        %1236 = vmatmul.mubr.f32.gmra.mrb[0].mxu0 %v930
        %v1237 = vpop.f32.mrb[0].mxu0
        %v1238 = vadd.f32 0.0, %v1237
        %v1239 = vpop.f32.mrb[0].mxu0
        %1240 = vmatprep.mubr.f32.mxu0 0.0
        %1241 = vmatmul.mubr.f32.gmra.mrb[0].mxu0 %v933
        %v1242 = vpop.f32.mrb[0].mxu0
        %v1243 = vadd.f32 0.0, %v1242
        %v1244 = vpop.f32.mrb[0].mxu0
        %1245 = vmatprep.mubr.f32.mxu0 0.0
        %1246 = vmatmul.mubr.f32.gmra.mrb[0].mxu0 %v936
        %v1247 = vpop.f32.mrb[0].mxu0
        %v1248 = vadd.f32 0.0, %v1247
        %v1249 = vpop.f32.mrb[0].mxu0
        %1250 = vmatprep.mubr.f32.mxu0 0.0
        %1251 = vmatmul.mubr.f32.gmra.mrb[0].mxu0 %v939
        %v1252 = vpop.f32.mrb[0].mxu0
        %v1253 = vadd.f32 0.0, %v1252
        %v1254 = vpop.f32.mrb[0].mxu0
        %1255 = vdwg.mxu0
        %1256 = vmatprep.subr.mxu0 0.0
        %1257 = vmatpush1.msra.mxu0 %v741
        %1258 = vmatprep.subr.mxu0 0.0
        %1259 = vmatpush1.msra.mxu0 %v746
        %1260 = vmatprep.subr.mxu0 0.0
        %1261 = vmatpush1.msra.mxu0 %v751
        %1262 = vmatprep.subr.mxu0 0.0
        %1263 = vmatpush1.msra.mxu0 %v756
        %1264 = vmatprep.subr.mxu0 0.0
        %1265 = vmatpush1.msra.mxu0 %v761
        %1266 = vmatprep.subr.mxu0 0.0
        %1267 = vmatpush1.msra.mxu0 %v766
        %1268 = vmatprep.subr.mxu0 0.0
        %1269 = vmatpush1.msra.mxu0 %v771
        %1270 = vmatprep.subr.mxu0 0.0
        %1271 = vmatpush1.msra.mxu0 %v776
        %1272 = vmatprep.subr.mxu0 0.0
        %1273 = vmatpush1.msra.mxu0 0.0
        %1274 = vmatprep.subr.mxu0 0.0
        %1275 = vmatpush1.msra.mxu0 0.0
        %1276 = vmatprep.subr.mxu0 0.0
        %1277 = vmatpush1.msra.mxu0 0.0
        %1278 = vmatprep.subr.mxu0 0.0
        %1279 = vmatpush1.msra.mxu0 0.0
        %1280 = vmatprep.subr.mxu0 0.0
        %1281 = vmatpush1.msra.mxu0 0.0
        %1282 = vmatprep.subr.mxu0 0.0
        %1283 = vmatpush1.msra.mxu0 0.0
        %1284 = vmatprep.subr.mxu0 0.0
        %1285 = vmatpush1.msra.mxu0 0.0
        %1286 = vmatprep.subr.mxu0 0.0
        %1287 = vmatpush1.msra.mxu0 0.0
        %1288 = vmatprep.subr.mxu0 0.0
        %1289 = vmatpush1.msra.mxu0 0.0
        %1290 = vmatprep.subr.mxu0 0.0
        %1291 = vmatpush1.msra.mxu0 0.0
        %1292 = vmatprep.subr.mxu0 0.0
        %1293 = vmatpush1.msra.mxu0 0.0
        %1294 = vmatprep.subr.mxu0 0.0
        %1295 = vmatpush1.msra.mxu0 0.0
        %1296 = vmatprep.subr.mxu0 0.0
        %1297 = vmatpush1.msra.mxu0 0.0
        %1298 = vmatprep.subr.mxu0 0.0
        %1299 = vmatpush1.msra.mxu0 0.0
        %1300 = vmatprep.subr.mxu0 0.0
        %1301 = vmatpush1.msra.mxu0 0.0
        %1302 = vmatprep.subr.mxu0 0.0
        %1303 = vmatpush1.msra.mxu0 0.0
        %1304 = vmatprep.subr.mxu0 0.0
        %1305 = vmatpush1.msra.mxu0 0.0
        %1306 = vmatprep.subr.mxu0 0.0
        %1307 = vmatpush1.msra.mxu0 0.0
        %1308 = vmatprep.subr.mxu0 0.0
        %1309 = vmatpush1.msra.mxu0 0.0
        %1310 = vmatprep.subr.mxu0 0.0
        %1311 = vmatpush1.msra.mxu0 0.0
        %1312 = vmatprep.subr.mxu0 0.0
        %1313 = vmatpush1.msra.mxu0 0.0
        %1314 = vmatprep.subr.mxu0 0.0
        %1315 = vmatpush1.msra.mxu0 0.0
        %1316 = vmatprep.subr.mxu0 0.0
        %1317 = vmatpush1.msra.mxu0 0.0
        %1318 = vmatprep.subr.mxu0 0.0
        %1319 = vmatpush1.msra.mxu0 0.0
        %1320 = vmatprep.mubr.f32.mxu0 0.0
        %1321 = vmatmul.mubr.f32.gmra.mrb[0].mxu0 %v918
        %v1322 = vpop.f32.mrb[0].mxu0
        %v1323 = vadd.f32 0.0, %v1322
        %v1324 = vpop.f32.mrb[0].mxu0
        %1325 = vmatprep.mubr.f32.mxu0 0.0
        %1326 = vmatmul.mubr.f32.gmra.mrb[0].mxu0 %v921
        %v1327 = vpop.f32.mrb[0].mxu0
        %v1328 = vadd.f32 0.0, %v1327
        %v1329 = vpop.f32.mrb[0].mxu0
        %1330 = vmatprep.mubr.f32.mxu0 0.0
        %1331 = vmatmul.mubr.f32.gmra.mrb[0].mxu0 %v924
        %v1332 = vpop.f32.mrb[0].mxu0
        %v1333 = vadd.f32 0.0, %v1332
        %v1334 = vpop.f32.mrb[0].mxu0
        %1335 = vmatprep.mubr.f32.mxu0 0.0
        %1336 = vmatmul.mubr.f32.gmra.mrb[0].mxu0 %v927
        %v1337 = vpop.f32.mrb[0].mxu0
        %v1338 = vadd.f32 0.0, %v1337
        %v1339 = vpop.f32.mrb[0].mxu0
        %1340 = vmatprep.mubr.f32.mxu0 0.0
        %1341 = vmatmul.mubr.f32.gmra.mrb[0].mxu0 %v930
        %v1342 = vpop.f32.mrb[0].mxu0
        %v1343 = vadd.f32 0.0, %v1342
        %v1344 = vpop.f32.mrb[0].mxu0
        %1345 = vmatprep.mubr.f32.mxu0 0.0
        %1346 = vmatmul.mubr.f32.gmra.mrb[0].mxu0 %v933
        %v1347 = vpop.f32.mrb[0].mxu0
        %v1348 = vadd.f32 0.0, %v1347
        %v1349 = vpop.f32.mrb[0].mxu0
        %1350 = vmatprep.mubr.f32.mxu0 0.0
        %1351 = vmatmul.mubr.f32.gmra.mrb[0].mxu0 %v936
        %v1352 = vpop.f32.mrb[0].mxu0
        %v1353 = vadd.f32 0.0, %v1352
        %v1354 = vpop.f32.mrb[0].mxu0
        %1355 = vmatprep.mubr.f32.mxu0 0.0
        %1356 = vmatmul.mubr.f32.gmra.mrb[0].mxu0 %v939
        %v1357 = vpop.f32.mrb[0].mxu0
        %v1358 = vadd.f32 0.0, %v1357
        %v1359 = vpop.f32.mrb[0].mxu0
        %1360 = vdwg.mxu0
        %1361 = vmatprep.subr.mxu0 0.0
        %1362 = vmatpush1.msra.mxu0 %v878
        %1363 = vmatprep.subr.mxu0 0.0
        %1364 = vmatpush1.msra.mxu0 %v883
        %1365 = vmatprep.subr.mxu0 0.0
        %1366 = vmatpush1.msra.mxu0 %v888
        %1367 = vmatprep.subr.mxu0 0.0
        %1368 = vmatpush1.msra.mxu0 %v893
        %1369 = vmatprep.subr.mxu0 0.0
        %1370 = vmatpush1.msra.mxu0 %v898
        %1371 = vmatprep.subr.mxu0 0.0
        %1372 = vmatpush1.msra.mxu0 %v903
        %1373 = vmatprep.subr.mxu0 0.0
        %1374 = vmatpush1.msra.mxu0 %v908
        %1375 = vmatprep.subr.mxu0 0.0
        %1376 = vmatpush1.msra.mxu0 %v913
        %1377 = vmatprep.subr.mxu0 0.0
        %1378 = vmatpush1.msra.mxu0 0.0
        %1379 = vmatprep.subr.mxu0 0.0
        %1380 = vmatpush1.msra.mxu0 0.0
        %1381 = vmatprep.subr.mxu0 0.0
        %1382 = vmatpush1.msra.mxu0 0.0
        %1383 = vmatprep.subr.mxu0 0.0
        %1384 = vmatpush1.msra.mxu0 0.0
        %1385 = vmatprep.subr.mxu0 0.0
        %1386 = vmatpush1.msra.mxu0 0.0
        %1387 = vmatprep.subr.mxu0 0.0
        %1388 = vmatpush1.msra.mxu0 0.0
        %1389 = vmatprep.subr.mxu0 0.0
        %1390 = vmatpush1.msra.mxu0 0.0
        %1391 = vmatprep.subr.mxu0 0.0
        %1392 = vmatpush1.msra.mxu0 0.0
        %1393 = vmatprep.subr.mxu0 0.0
        %1394 = vmatpush1.msra.mxu0 0.0
        %1395 = vmatprep.subr.mxu0 0.0
        %1396 = vmatpush1.msra.mxu0 0.0
        %1397 = vmatprep.subr.mxu0 0.0
        %1398 = vmatpush1.msra.mxu0 0.0
        %1399 = vmatprep.subr.mxu0 0.0
        %1400 = vmatpush1.msra.mxu0 0.0
        %1401 = vmatprep.subr.mxu0 0.0
        %1402 = vmatpush1.msra.mxu0 0.0
        %1403 = vmatprep.subr.mxu0 0.0
        %1404 = vmatpush1.msra.mxu0 0.0
        %1405 = vmatprep.subr.mxu0 0.0
        %1406 = vmatpush1.msra.mxu0 0.0
        %1407 = vmatprep.subr.mxu0 0.0
        %1408 = vmatpush1.msra.mxu0 0.0
        %1409 = vmatprep.subr.mxu0 0.0
        %1410 = vmatpush1.msra.mxu0 0.0
        %1411 = vmatprep.subr.mxu0 0.0
        %1412 = vmatpush1.msra.mxu0 0.0
        %1413 = vmatprep.subr.mxu0 0.0
        %1414 = vmatpush1.msra.mxu0 0.0
        %1415 = vmatprep.subr.mxu0 0.0
        %1416 = vmatpush1.msra.mxu0 0.0
        %1417 = vmatprep.subr.mxu0 0.0
        %1418 = vmatpush1.msra.mxu0 0.0
        %1419 = vmatprep.subr.mxu0 0.0
        %1420 = vmatpush1.msra.mxu0 0.0
        %1421 = vmatprep.subr.mxu0 0.0
        %1422 = vmatpush1.msra.mxu0 0.0
        %1423 = vmatprep.subr.mxu0 0.0
        %1424 = vmatpush1.msra.mxu0 0.0
        %1425 = vmatprep.mubr.f32.mxu0 0.0
        %1426 = vmatmul.mubr.f32.gmra.mrb[0].mxu0 %v918
        %v1427 = vpop.f32.mrb[0].mxu0
        %v1428 = vadd.f32 0.0, %v1427
        %v1429 = vpop.f32.mrb[0].mxu0
        %1430 = vmatprep.mubr.f32.mxu0 0.0
        %1431 = vmatmul.mubr.f32.gmra.mrb[0].mxu0 %v921
        %v1432 = vpop.f32.mrb[0].mxu0
        %v1433 = vadd.f32 0.0, %v1432
        %v1434 = vpop.f32.mrb[0].mxu0
        %1435 = vmatprep.mubr.f32.mxu0 0.0
        %1436 = vmatmul.mubr.f32.gmra.mrb[0].mxu0 %v924
        %v1437 = vpop.f32.mrb[0].mxu0
        %v1438 = vadd.f32 0.0, %v1437
        %v1439 = vpop.f32.mrb[0].mxu0
        %1440 = vmatprep.mubr.f32.mxu0 0.0
        %1441 = vmatmul.mubr.f32.gmra.mrb[0].mxu0 %v927
        %v1442 = vpop.f32.mrb[0].mxu0
        %v1443 = vadd.f32 0.0, %v1442
        %v1444 = vpop.f32.mrb[0].mxu0
        %1445 = vmatprep.mubr.f32.mxu0 0.0
        %1446 = vmatmul.mubr.f32.gmra.mrb[0].mxu0 %v930
        %v1447 = vpop.f32.mrb[0].mxu0
        %v1448 = vadd.f32 0.0, %v1447
        %v1449 = vpop.f32.mrb[0].mxu0
        %1450 = vmatprep.mubr.f32.mxu0 0.0
        %1451 = vmatmul.mubr.f32.gmra.mrb[0].mxu0 %v933
        %v1452 = vpop.f32.mrb[0].mxu0
        %v1453 = vadd.f32 0.0, %v1452
        %v1454 = vpop.f32.mrb[0].mxu0
        %1455 = vmatprep.mubr.f32.mxu0 0.0
        %1456 = vmatmul.mubr.f32.gmra.mrb[0].mxu0 %v936
        %v1457 = vpop.f32.mrb[0].mxu0
        %v1458 = vadd.f32 0.0, %v1457
        %v1459 = vpop.f32.mrb[0].mxu0
        %1460 = vmatprep.mubr.f32.mxu0 0.0
        %1461 = vmatmul.mubr.f32.gmra.mrb[0].mxu0 %v939
        %v1462 = vpop.f32.mrb[0].mxu0
        %v1463 = vadd.f32 0.0, %v1462
        %v1464 = vpop.f32.mrb[0].mxu0
        %1465 = vdwg.mxu0
        %v1466 = vmul.f32 %v1008, %v1008
        %v1467 = vmul.f32 %v1013, %v1013
        %v1468 = vmul.f32 %v1018, %v1018
        %v1469 = vmul.f32 %v1023, %v1023
        %v1470 = vmul.f32 %v1028, %v1028
        %v1471 = vmul.f32 %v1033, %v1033
        %v1472 = vmul.f32 %v1038, %v1038
        %v1473 = vmul.f32 %v1043, %v1043
        %v1474 = vmul.f32 %v1113, %v1113
        %v1475 = vmul.f32 %v1118, %v1118
        %v1476 = vmul.f32 %v1123, %v1123
        %v1477 = vmul.f32 %v1128, %v1128
        %v1478 = vmul.f32 %v1133, %v1133
        %v1479 = vmul.f32 %v1138, %v1138
        %v1480 = vmul.f32 %v1143, %v1143
        %v1481 = vmul.f32 %v1148, %v1148
        %v1482 = vmul.f32 %v1008, %v1113
        %v1483 = vmul.f32 %v1013, %v1118
        %v1484 = vmul.f32 %v1018, %v1123
        %v1485 = vmul.f32 %v1023, %v1128
        %v1486 = vmul.f32 %v1028, %v1133
        %v1487 = vmul.f32 %v1033, %v1138
        %v1488 = vmul.f32 %v1038, %v1143
        %v1489 = vmul.f32 %v1043, %v1148
        %v1490 = vmul.f32 %v1482, 2.0
        %v1491 = vmul.f32 %v1483, 2.0
        %v1492 = vmul.f32 %v1484, 2.0
        %v1493 = vmul.f32 %v1485, 2.0
        %v1494 = vmul.f32 %v1486, 2.0
        %v1495 = vmul.f32 %v1487, 2.0
        %v1496 = vmul.f32 %v1488, 2.0
        %v1497 = vmul.f32 %v1489, 2.0
        %v1498 = vadd.f32 %v1490, 0.0001
        %v1499 = vadd.f32 %v1491, 0.0001
        %v1500 = vadd.f32 %v1492, 0.0001
        %v1501 = vadd.f32 %v1493, 0.0001
        %v1502 = vadd.f32 %v1494, 0.0001
        %v1503 = vadd.f32 %v1495, 0.0001
        %v1504 = vadd.f32 %v1496, 0.0001
        %v1505 = vadd.f32 %v1497, 0.0001
        %v1506 = vsub.f32 %v1428, %v1482
        %v1507 = vsub.f32 %v1433, %v1483
        %v1508 = vsub.f32 %v1438, %v1484
        %v1509 = vsub.f32 %v1443, %v1485
        %v1510 = vsub.f32 %v1448, %v1486
        %v1511 = vsub.f32 %v1453, %v1487
        %v1512 = vsub.f32 %v1458, %v1488
        %v1513 = vsub.f32 %v1463, %v1489
        %v1514 = vmul.f32 %v1506, 2.0
        %v1515 = vmul.f32 %v1507, 2.0
        %v1516 = vmul.f32 %v1508, 2.0
        %v1517 = vmul.f32 %v1509, 2.0
        %v1518 = vmul.f32 %v1510, 2.0
        %v1519 = vmul.f32 %v1511, 2.0
        %v1520 = vmul.f32 %v1512, 2.0
        %v1521 = vmul.f32 %v1513, 2.0
        %v1522 = vadd.f32 %v1514, 0.0009
        %v1523 = vadd.f32 %v1515, 0.0009
        %v1524 = vadd.f32 %v1516, 0.0009
        %v1525 = vadd.f32 %v1517, 0.0009
        %v1526 = vadd.f32 %v1518, 0.0009
        %v1527 = vadd.f32 %v1519, 0.0009
        %v1528 = vadd.f32 %v1520, 0.0009
        %v1529 = vadd.f32 %v1521, 0.0009
        %v1530 = vmul.f32 %v1498, %v1522
        %v1531 = vmul.f32 %v1499, %v1523
        %v1532 = vmul.f32 %v1500, %v1524
        %v1533 = vmul.f32 %v1501, %v1525
        %v1534 = vmul.f32 %v1502, %v1526
        %v1535 = vmul.f32 %v1503, %v1527
        %v1536 = vmul.f32 %v1504, %v1528
        %v1537 = vmul.f32 %v1505, %v1529
        %v1538 = vadd.f32 %v1466, %v1474
        %v1539 = vadd.f32 %v1467, %v1475
        %v1540 = vadd.f32 %v1468, %v1476
        %v1541 = vadd.f32 %v1469, %v1477
        %v1542 = vadd.f32 %v1470, %v1478
        %v1543 = vadd.f32 %v1471, %v1479
        %v1544 = vadd.f32 %v1472, %v1480
        %v1545 = vadd.f32 %v1473, %v1481
        %v1546 = vadd.f32 %v1538, 0.0001
        %v1547 = vadd.f32 %v1539, 0.0001
        %v1548 = vadd.f32 %v1540, 0.0001
        %v1549 = vadd.f32 %v1541, 0.0001
        %v1550 = vadd.f32 %v1542, 0.0001
        %v1551 = vadd.f32 %v1543, 0.0001
        %v1552 = vadd.f32 %v1544, 0.0001
        %v1553 = vadd.f32 %v1545, 0.0001
        %v1554 = vsub.f32 %v1218, %v1466
        %v1555 = vsub.f32 %v1223, %v1467
        %v1556 = vsub.f32 %v1228, %v1468
        %v1557 = vsub.f32 %v1233, %v1469
        %v1558 = vsub.f32 %v1238, %v1470
        %v1559 = vsub.f32 %v1243, %v1471
        %v1560 = vsub.f32 %v1248, %v1472
        %v1561 = vsub.f32 %v1253, %v1473
        %v1562 = vsub.f32 %v1323, %v1474
        %v1563 = vsub.f32 %v1328, %v1475
        %v1564 = vsub.f32 %v1333, %v1476
        %v1565 = vsub.f32 %v1338, %v1477
        %v1566 = vsub.f32 %v1343, %v1478
        %v1567 = vsub.f32 %v1348, %v1479
        %v1568 = vsub.f32 %v1353, %v1480
        %v1569 = vsub.f32 %v1358, %v1481
        %v1570 = vadd.f32 %v1554, %v1562
        %v1571 = vadd.f32 %v1555, %v1563
        %v1572 = vadd.f32 %v1556, %v1564
        %v1573 = vadd.f32 %v1557, %v1565
        %v1574 = vadd.f32 %v1558, %v1566
        %v1575 = vadd.f32 %v1559, %v1567
        %v1576 = vadd.f32 %v1560, %v1568
        %v1577 = vadd.f32 %v1561, %v1569
        %v1578 = vadd.f32 %v1570, 0.0009
        %v1579 = vadd.f32 %v1571, 0.0009
        %v1580 = vadd.f32 %v1572, 0.0009
        %v1581 = vadd.f32 %v1573, 0.0009
        %v1582 = vadd.f32 %v1574, 0.0009
        %v1583 = vadd.f32 %v1575, 0.0009
        %v1584 = vadd.f32 %v1576, 0.0009
        %v1585 = vadd.f32 %v1577, 0.0009
        %v1586 = vmul.f32 %v1546, %v1578
        %v1587 = vmul.f32 %v1547, %v1579
        %v1588 = vmul.f32 %v1548, %v1580
        %v1589 = vmul.f32 %v1549, %v1581
        %v1590 = vmul.f32 %v1550, %v1582
        %v1591 = vmul.f32 %v1551, %v1583
        %v1592 = vmul.f32 %v1552, %v1584
        %v1593 = vmul.f32 %v1553, %v1585
        %v1594 = vrcp.pop %v1586
        %v1595 = vrcp.pop %v1587
        %v1596 = vrcp.pop %v1588
        %v1597 = vrcp.pop %v1589
        %v1598 = vrcp.pop %v1590
        %v1599 = vrcp.pop %v1591
        %v1600 = vrcp.pop %v1592
        %v1601 = vrcp.pop %v1593
        %v1602 = vmul.f32 %v1530, %v1594
        %v1603 = vmul.f32 %v1531, %v1595
        %v1604 = vmul.f32 %v1532, %v1596
        %v1605 = vmul.f32 %v1533, %v1597
        %v1606 = vmul.f32 %v1534, %v1598
        %v1607 = vmul.f32 %v1535, %v1599
        %v1608 = vmul.f32 %v1536, %v1600
        %v1609 = vmul.f32 %v1537, %v1601
        %v1610 = vsel %vm246, %v1602, 0.0
        %v1611 = vsel %vm246, %v1603, 0.0
        %v1612 = vadd.f32 %v1610, %v1611
        %v1613 = vsel %vm246, %v1604, 0.0
        %v1614 = vadd.f32 %v1612, %v1613
        %v1615 = vsel %vm246, %v1605, 0.0
        %v1616 = vadd.f32 %v1614, %v1615
        %v1617 = vsel %vm246, %v1606, 0.0
        %v1618 = vadd.f32 %v1616, %v1617
        %v1619 = vsel %vm246, %v1607, 0.0
        %v1620 = vadd.f32 %v1618, %v1619
        %v1621 = vsel %vm246, %v1608, 0.0
        %v1622 = vadd.f32 %v1620, %v1621
        %v1623 = vsel %vm246, %v1609, 0.0
        %v1624 = vadd.f32 %v1622, %v1623
        %1625 = vadd.xlane.f32.xlu0 %v1624
        %v1626 = vpop.xlane.xlu0 %1625
        %v1627 = vrot.slane %v1626, 4
        %v1628 = vadd.f32 %v1626, %v1627
        %v1629 = vrot.slane %v1628, 2
        %v1630 = vadd.f32 %v1628, %v1629
        %v1631 = vrot.slane %v1630, 1
        %v1632 = vadd.f32 %v1630, %v1631
        %s1633 = vtos %v1632
        %v1634 = vstv %s1633
        %v1635 = vadd.f32 %v1634, 0.0
        %1636 = vst [vmem:[%s207] sm:$0xff] %v1635
        %s1637 = sand.u32 %s120, 1
        %s1638 = scalar_lea.sflag [#allocation3], %s1637
        %s1639 = sand.u32 %s120, 1
        %s1640 = smul.addr %s1639, 8
        %s1641 = scalar_lea.vmem [#allocation2], %s1640
        // Predicated region
        $region37: #{tpu_custom_call.1} parent=35 // pred_check
          %p1642 = pneg %p130
        $region38: #{tpu_custom_call.1} parent=35 // pred_check_branch
          %1644 = sbr.rel (%p1642) target = $region40
        $region39: #{tpu_custom_call.1} parent=35 // pred_region
          %s1646 = ssub.s32 128, 128
          %1647 = vsyncadd %s1638, %s1646
          %s1648 = smul.addr %s18, 128
          %s1649 = scalar_lea.hbm %s4, %s1648
          %s1651 = sshll.u32 %s1641, 4
          %s1652 = int_to_ptr.vmem [resolvable:$true] %s1651
          %1654 = dma.vmem_to_hbm [thread:$0]  %s1652, 128, %s1649, %s1638
        $region40: #{tpu_custom_call.1} parent=35 // pred_fallthru
          _
      $region36: #{tpu_custom_call.1} parent=5 // pred_fallthru
        _
      %p1655 = scmp.le.s32.totalorder 2, %s13
      // Predicated region
      $region41: #{tpu_custom_call.1} parent=5 // pred_check
        %p1656 = pneg %p1655
      $region42: #{tpu_custom_call.1} parent=5 // pred_check_branch
        %1658 = sbr.rel (%p1656) target = $region44
      $region43: #{tpu_custom_call.1} parent=5 // pred_region
        %s1659 = ssub.s32 %s13, 2
        // Predicated region
        $region45: #{tpu_custom_call.1} parent=43 // pred_check
          %p1660 = pneg %p136
        $region46: #{tpu_custom_call.1} parent=43 // pred_check_branch
          %1662 = sbr.rel (%p1660) target = $region48
        $region47: #{tpu_custom_call.1} parent=43 // pred_region
          %s1663 = sand.u32 %s121, 1
          %s1664 = scalar_lea.sflag [#allocation3], %s1663
          %s1665 = sand.u32 %s121, 1
          %s1666 = smul.addr %s1665, 8
          %s1667 = scalar_lea.vmem [#allocation2], %s1666
          %1668 = dma.done %s1664, 128
        $region48: #{tpu_custom_call.1} parent=43 // pred_fallthru
          _
      $region44: #{tpu_custom_call.1} parent=5 // pred_fallthru
        _
    $region6: #{tpu_custom_call.1} parent=1 // loop_footer
      %s17 = sadd.s32 1, %s13
    $region7: #{tpu_custom_call.1} parent=1 // loop_footer_branch
      %12 = sbr.rel target = $region3
    $region8: #{tpu_custom_call.1} parent=1 // loop_exit
      _
    %1669 = vsyncpa [#allocation3], 1
    %s1670 = scalar_lea.sflag [#allocation3], 1
    %1671 = vsyncpa %s1670, 1

</llo_original>
